<compile_context>
chip_gen: v7x
topology: tpu7x:2x2x1
jax: 0.10.0
libtpu: 0.0.40
codegen_flags: <defaults>
</compile_context>

<pallas_src>
import jax
import jax.numpy as jnp
from jax import lax
from jax.experimental import pallas as pl
from jax.experimental.pallas import tpu as pltpu


# ------------------------------ fused kernel ------------------------------- #

def _in_lrelu(h, eps=1e-5, slope=0.01):
    # InstanceNorm2d (affine=False, biased var) + LeakyReLU on a channel-major (C, HW)
    # slab, f32.  One pass for both moments; maximum() instead of compare+select.
    mean = jnp.mean(h, axis=1, keepdims=True)
    msq = jnp.mean(h * h, axis=1, keepdims=True)
    var = msq - mean * mean
    hn = (h - mean) * lax.rsqrt(var + eps)
    return jnp.maximum(hn, slope * hn)


def _make_fused_kernel(H, W, C1, C2, pad_rows, blk):
    HW = H * W

    def kernel(x_ref, cm_ref, w1_ref, w2_ref, w3_ref, w4_ref, b4_ref, org_ref,
               o_ref, hpad_ref):
        # Zero the scratch pad rows every grid step (per-core scratch under "parallel"
        # semantics -> cannot guard on program_id(0) == 0).  The pad rows are what give
        # the 3x3 convs their zero-padding semantics along the row (oy) direction.
        hpad_ref[0:pad_rows, :] = jnp.zeros((pad_rows, C1), jnp.float32)
        hpad_ref[HW + pad_rows:HW + 2 * pad_rows, :] = jnp.zeros((pad_rows, C1),
                                                                 jnp.float32)

        cm_neg = cm_ref[0:1, :]          # (1, HW): valid where w-1 >= 0
        cm_pos = cm_ref[1:2, :]          # (1, HW): valid where w+1 <  W
        b4 = b4_ref[...]                 # (2, 1)
        origin = org_ref[...]            # (2, HW)

        for b in range(blk):
            # ---- conv1: 3x3, Cin -> C1.  ox taps K-fused in glue (K = 3*Cin) -------
            # Input is pre-shifted / zero-filled / row-padded bf16, so no masks are
            # needed and every slice start (pad_rows + oy*W) is aligned.
            acc1 = jnp.zeros((C1, HW), jnp.float32)
            for ti, oy in enumerate((-1, 0, 1)):
                s = pad_rows + oy * W
                sl = x_ref[b, s:s + HW, :]                          # (HW, 3*Cin) bf16
                acc1 = acc1 + lax.dot_general(
                    w1_ref[ti], sl, (((1,), (1,)), ((), ())),
                    preferred_element_type=jnp.float32)             # (C1, HW)
            # Conv biases omitted: InstanceNorm removes per-channel constants exactly.
            h1 = _in_lrelu(acc1)                                     # (C1, HW) f32

            # ---- stage h1 pixel-major into the row-padded scratch ------------------
            hpad_ref[pad_rows:pad_rows + HW, :] = jnp.transpose(h1)  # (HW, C1) f32

            # ---- conv2: 3x3, C1 -> C2; post-dot lane-dense column masks ------------
            acc2 = jnp.zeros((C2, HW), jnp.float32)
            for ox in (-1, 0, 1):
                # One covering load per ox (HW + 2W rows); the three oy windows are
                # then vreg-aligned slices of the loaded value (<= 2 misaligned loads
                # total instead of 6).
                base = pad_rows + ox - W
                big = hpad_ref[base:base + HW + 2 * W, :]            # (HW+2W, C1)
                part = jnp.zeros((C2, HW), jnp.float32)
                for oyi, oy in enumerate((-1, 0, 1)):
                    t = (oy + 1) * 3 + (ox + 1)
                    sl = big[oyi * W:oyi * W + HW, :]                # (HW, C1)
                    part = part + lax.dot_general(
                        w2_ref[t], sl, (((1,), (1,)), ((), ())),
                        preferred_element_type=jnp.float32)          # (C2, HW)
                if ox == -1:
                    part = part * cm_neg
                elif ox == 1:
                    part = part * cm_pos
                acc2 = acc2 + part
            h2 = _in_lrelu(acc2)                                     # (C2, HW)

            # ---- 1x1 convs, all channel-major --------------------------------------
            h3 = _in_lrelu(lax.dot_general(
                w3_ref[...], h2, (((1,), (0,)), ((), ())),
                preferred_element_type=jnp.float32))                 # (C3, HW)

            out = lax.dot_general(
                w4_ref[...], h3, (((1,), (0,)), ((), ())),
                preferred_element_type=jnp.float32)                  # (2, HW)
            # Lane-dense (2, HW) store == NCHW-flat layout of the PyTorch reshape quirk.
            o_ref[b] = out + b4 + origin

    return kernel


# ------------------------------ glue wrapper -------------------------------- #

def make_grid_origin(H, W):
    # F.affine_grid(identity, size=(1,1,H,W)), align_corners=False (PyTorch default).
    xs = (2.0 * jnp.arange(W, dtype=jnp.float32) + 1.0) / W - 1.0
    ys = (2.0 * jnp.arange(H, dtype=jnp.float32) + 1.0) / H - 1.0
    gx = jnp.broadcast_to(xs[None, :], (H, W))
    gy = jnp.broadcast_to(ys[:, None], (H, W))
    return jnp.stack([gx, gy], axis=-1)                      # (H, W, 2)


def arbitrary_offset_forward(x_nchw, params):
    """Fused Pallas implementation of ArbitraryOffset.forward. Returns (N, H, W, 2)."""
    w1, b1, w2, b2, w3, b3, w4, b4 = params
    N, Cin, H, W = x_nchw.shape
    HW = H * W
    C1, C2, C3 = w1.shape[-1], w2.shape[-1], w3.shape[-1]

    # Row padding (flat pixel space) so conv oy-taps are static, in-bounds slices.
    # Needs >= W+1 rows; multiple of 16 keeps the bf16 conv1 slices sublane-aligned.
    pad_rows = ((W + 1 + 15) // 16) * 16
    HWpad = HW + 2 * pad_rows

    # Samples per grid step: amortize per-step overhead for big batches but keep
    # >= 2 grid steps so v7x's two TensorCores both get work.
    if N >= 16:
        blk = 8
    elif N >= 4:
        blk = 2
    else:
        blk = 1
    grid_n = -(-N // blk)
    N_pad = grid_n * blk

    # conv1 im2col-lite in glue: three ox-shifted, zero-filled copies concatenated
    # channel-wise (K = 3*Cin), row-padded with zeros, bf16 MXU operand.
    x_nhwc = jnp.transpose(x_nchw, (0, 2, 3, 1)).astype(jnp.float32)     # (N,H,W,Cin)
    xw = jnp.pad(x_nhwc, ((0, 0), (0, 0), (1, 1), (0, 0)))               # (N,H,W+2,Cin)
    x3 = jnp.concatenate([xw[:, :, 0:W], xw[:, :, 1:W + 1], xw[:, :, 2:W + 2]],
                         axis=-1)                                        # ox=-1,0,+1
    x3 = x3.reshape(N, HW, 3 * Cin)
    x3 = jnp.pad(x3, ((0, N_pad - N), (pad_rows, pad_rows), (0, 0)))
    x3 = x3.astype(jnp.bfloat16)                                         # (N_pad,HWpad,3Cin)

    # Column-validity masks for conv2's ox = -1 / +1 taps (lane-dense (1, HW) rows).
    wcol = jnp.arange(HW, dtype=jnp.int32) % W
    colmask = jnp.stack([wcol >= 1, wcol <= W - 2], axis=0).astype(jnp.float32)

    # Weights as channel-major LHS operands.  conv1 is bf16 (tap-fused over ox,
    # oy-major); everything after conv1 stays f32 (MXU time is negligible at these
    # sizes, and f32 slices of the scratch avoid packed-dtype odd-offset relayouts).
    w1t = jnp.transpose(w1.reshape(3, 3 * Cin, C1), (0, 2, 1)).astype(jnp.bfloat16)
    w2t = jnp.transpose(w2.reshape(9, C1, C2), (0, 2, 1)).astype(jnp.float32)
    w3t = jnp.transpose(w3).astype(jnp.float32)          # (C3, C2)
    w4t = jnp.transpose(w4).astype(jnp.float32)          # (2, C3)
    b4c = b4.reshape(2, 1).astype(jnp.float32)
    # b1/b2/b3 are intentionally unused: InstanceNorm removes per-channel biases.

    # affine_grid origin, pre-arranged as the (2, HW) NCHW-flat slab implied by the
    # PyTorch `x.reshape(N, H, W, 2)` quirk (so the in-kernel add is exact).
    origin_t = make_grid_origin(H, W).reshape(2, HW)

    kernel = _make_fused_kernel(H, W, C1, C2, pad_rows, blk)

    out_t = pl.pallas_call(
        kernel,
        out_shape=jax.ShapeDtypeStruct((N_pad, 2, HW), jnp.float32),
        grid=(grid_n,),
        in_specs=[
            pl.BlockSpec((blk, HWpad, 3 * Cin), lambda n: (n, 0, 0)),
            pl.BlockSpec((2, HW), lambda n: (0, 0)),
            pl.BlockSpec((3, C1, 3 * Cin), lambda n: (0, 0, 0)),
            pl.BlockSpec((9, C2, C1), lambda n: (0, 0, 0)),
            pl.BlockSpec((C3, C2), lambda n: (0, 0)),
            pl.BlockSpec((2, C3), lambda n: (0, 0)),
            pl.BlockSpec((2, 1), lambda n: (0, 0)),
            pl.BlockSpec((2, HW), lambda n: (0, 0)),
        ],
        out_specs=pl.BlockSpec((blk, 2, HW), lambda n: (n, 0, 0)),
        scratch_shapes=[pltpu.VMEM((HWpad, C1), jnp.float32)],
        compiler_params=pltpu.CompilerParams(dimension_semantics=("parallel",)),
    )(x3, colmask, w1t, w2t, w3t, w4t, b4c, origin_t)

    # (N, 2, HW) is already NCHW-flat; this reshape IS the PyTorch reshape quirk.
    return out_t[:N].reshape(N, H, W, 2)


# --------------------------- pure-JAX reference ----------------------------- #

def _ref_instnorm(h, eps=1e-5):
    mean = jnp.mean(h, axis=(1, 2), keepdims=True)
    var = jnp.mean((h - mean) ** 2, axis=(1, 2), keepdims=True)
    return (h - mean) * lax.rsqrt(var + eps)


def _ref_lrelu(x, slope=0.01):
    return jnp.where(x >= 0, x, slope * x)


def reference_forward(x_nchw, params):
    w1, b1, w2, b2, w3, b3, w4, b4 = params
    N, _, H, W = x_nchw.shape
    dn = ("NHWC", "HWIO", "NHWC")
    x = jnp.transpose(x_nchw, (0, 2, 3, 1)).astype(jnp.float32)
    h = lax.conv_general_dilated(x, w1, (1, 1), "SAME", dimension_numbers=dn) + b1
    h = _ref_lrelu(_ref_instnorm(h))
    h = lax.conv_general_dilated(h, w2, (1, 1), "SAME", dimension_numbers=dn) + b2
    h = _ref_lrelu(_ref_instnorm(h))
    h = jnp.einsum("nhwc,cd->nhwd", h, w3) + b3
    h = _ref_lrelu(_ref_instnorm(h))
    h = jnp.einsum("nhwc,cd->nhwd", h, w4) + b4              # (N, H, W, 2), NHWC
    res_nchw = jnp.transpose(h, (0, 3, 1, 2))                # back to NCHW
    grid_res = res_nchw.reshape(N, H, W, 2)                  # PyTorch reshape quirk
    return grid_res + make_grid_origin(H, W)[None]


# ---------------------------------- main ------------------------------------ #

if __name__ == "__main__":
    key = jax.random.PRNGKey(0)
    N, C_feat, H, W = 2, 4, 16, 16
    in_ch = 2 * C_feat            # module takes concatenated features
    hidden = 32

    ks = jax.random.split(key, 9)
    x_nchw = jax.random.normal(ks[0], (N, in_ch, H, W), jnp.float32)

    # Deterministic synthetic parameters (HWIO for 3x3 convs, (Cin, Cout) for 1x1).
    w1 = jax.random.normal(ks[1], (3, 3, in_ch, hidden), jnp.float32) * 0.1
    b1 = jax.random.normal(ks[2], (hidden,), jnp.float32) * 0.1
    w2 = jax.random.normal(ks[3], (3, 3, hidden, hidden // 2), jnp.float32) * 0.1
    b2 = jax.random.normal(ks[4], (hidden // 2,), jnp.float32) * 0.1
    w3 = jax.random.normal(ks[5], (hidden // 2, hidden // 4), jnp.float32) * 0.1
    b3 = jax.random.normal(ks[6], (hidden // 4,), jnp.float32) * 0.1
    w4 = jax.random.normal(ks[7], (hidden // 4, 2), jnp.float32) * 0.1
    b4 = jax.random.normal(ks[8], (2,), jnp.float32) * 0.1
    params = (w1, b1, w2, b2, w3, b3, w4, b4)

    out = arbitrary_offset_forward(x_nchw, params)
    out = jax.block_until_ready(out)

    ref = reference_forward(x_nchw, params)
    assert out.shape == (N, H, W, 2), out.shape
    assert bool(jnp.allclose(out, ref, rtol=2e-2, atol=2e-2)), "mismatch vs reference"

    print("KERNEL_OK")
</pallas_src>

<mosaic_0001>
module attributes {stable_mosaic.version = 11 : i64} {
  func.func @kernel(%arg0: i32, %arg1: memref<1x320x24xbf16, #tpu.memory_space<vmem>>, %arg2: memref<2x256xf32, #tpu.memory_space<vmem>>, %arg3: memref<3x32x24xbf16, #tpu.memory_space<vmem>>, %arg4: memref<9x16x32xf32, #tpu.memory_space<vmem>>, %arg5: memref<8x16xf32, #tpu.memory_space<vmem>>, %arg6: memref<2x8xf32, #tpu.memory_space<vmem>>, %arg7: memref<2x1xf32, #tpu.memory_space<vmem>>, %arg8: memref<2x256xf32, #tpu.memory_space<vmem>>, %arg9: memref<1x2x256xf32, #tpu.memory_space<vmem>>, %arg10: memref<320x32xf32, #tpu.memory_space<vmem>>) attributes {dimension_semantics = [#tpu.dimension_semantics<parallel>], iteration_bounds = array<i64: 2>, scalar_prefetch = 0 : i64, scratch_operands = 1 : i64, tpu.core_type = #tpu.core_type<tc>, window_params = [{transform_indices = @transform_0, window_bounds = array<i64: 1, 320, 24>}, {pipeline_mode = #tpu.pipeline_mode<synchronous>, transform_indices = @transform_1, window_bounds = array<i64: 2, 256>}, {pipeline_mode = #tpu.pipeline_mode<synchronous>, transform_indices = @transform_2, window_bounds = array<i64: 3, 32, 24>}, {pipeline_mode = #tpu.pipeline_mode<synchronous>, transform_indices = @transform_3, window_bounds = array<i64: 9, 16, 32>}, {pipeline_mode = #tpu.pipeline_mode<synchronous>, transform_indices = @transform_4, window_bounds = array<i64: 8, 16>}, {pipeline_mode = #tpu.pipeline_mode<synchronous>, transform_indices = @transform_5, window_bounds = array<i64: 2, 8>}, {pipeline_mode = #tpu.pipeline_mode<synchronous>, transform_indices = @transform_6, window_bounds = array<i64: 2, 1>}, {pipeline_mode = #tpu.pipeline_mode<synchronous>, transform_indices = @transform_7, window_bounds = array<i64: 2, 256>}, {transform_indices = @transform_8, window_bounds = array<i64: 1, 2, 256>}]} {
    %cst = arith.constant 0.000000e+00 : f32
    %0 = vector.broadcast %cst : f32 to vector<32x32xf32>
    %c0 = arith.constant 0 : index
    %c0_0 = arith.constant 0 : index
    %1 = vector.load %arg10[%c0, %c0_0] : memref<320x32xf32, #tpu.memory_space<vmem>>, vector<32x32xf32>
    tpu.vector_store %arg10[%c0, %c0_0], %0 {strides = array<i32>} : memref<320x32xf32, #tpu.memory_space<vmem>>, vector<32x32xf32>,
    %cst_1 = arith.constant 0.000000e+00 : f32
    %2 = vector.broadcast %cst_1 : f32 to vector<32x32xf32>
    %c288 = arith.constant 288 : index
    %c0_2 = arith.constant 0 : index
    %3 = vector.load %arg10[%c288, %c0_2] : memref<320x32xf32, #tpu.memory_space<vmem>>, vector<32x32xf32>
    tpu.vector_store %arg10[%c288, %c0_2], %2 {strides = array<i32>} : memref<320x32xf32, #tpu.memory_space<vmem>>, vector<32x32xf32>,
    %c0_3 = arith.constant 0 : index
    %c0_4 = arith.constant 0 : index
    %4 = vector.load %arg2[%c0_3, %c0_4] : memref<2x256xf32, #tpu.memory_space<vmem>>, vector<1x256xf32>
    %c1 = arith.constant 1 : index
    %c0_5 = arith.constant 0 : index
    %5 = vector.load %arg2[%c1, %c0_5] : memref<2x256xf32, #tpu.memory_space<vmem>>, vector<1x256xf32>
    %c0_6 = arith.constant 0 : index
    %c0_7 = arith.constant 0 : index
    %6 = vector.load %arg7[%c0_6, %c0_7] : memref<2x1xf32, #tpu.memory_space<vmem>>, vector<2x1xf32>
    %c0_8 = arith.constant 0 : index
    %c0_9 = arith.constant 0 : index
    %7 = vector.load %arg8[%c0_8, %c0_9] : memref<2x256xf32, #tpu.memory_space<vmem>>, vector<2x256xf32>
    %cst_10 = arith.constant 0.000000e+00 : f32
    %8 = vector.broadcast %cst_10 : f32 to vector<32x256xf32>
    %c0_11 = arith.constant 0 : index
    %c16 = arith.constant 16 : index
    %c0_12 = arith.constant 0 : index
    %9 = vector.load %arg1[%c0_11, %c16, %c0_12] : memref<1x320x24xbf16, #tpu.memory_space<vmem>>, vector<1x256x24xbf16>
    %10 = vector.shape_cast %9 : vector<1x256x24xbf16> to vector<256x24xbf16>
    %c0_13 = arith.constant 0 : index
    %c0_14 = arith.constant 0 : index
    %c0_15 = arith.constant 0 : index
    %11 = vector.load %arg3[%c0_13, %c0_14, %c0_15] : memref<3x32x24xbf16, #tpu.memory_space<vmem>>, vector<1x32x24xbf16>
    %12 = vector.shape_cast %11 : vector<1x32x24xbf16> to vector<32x24xbf16>
    %cst_16 = arith.constant dense<0.000000e+00> : vector<32x256xf32>
    %13 = tpu.matmul %12, %10, %cst_16 {dimension_numbers = #tpu.dot_dimension_numbers<[1], [1], [0], [0], [0, 0, 1, 0], [], []>} : vector<32x24xbf16>, vector<256x24xbf16>, vector<32x256xf32> -> vector<32x256xf32>
    %14 = arith.addf %8, %13 : vector<32x256xf32>
    %c0_17 = arith.constant 0 : index
    %c32 = arith.constant 32 : index
    %c0_18 = arith.constant 0 : index
    %15 = vector.load %arg1[%c0_17, %c32, %c0_18] : memref<1x320x24xbf16, #tpu.memory_space<vmem>>, vector<1x256x24xbf16>
    %16 = vector.shape_cast %15 : vector<1x256x24xbf16> to vector<256x24xbf16>
    %c1_19 = arith.constant 1 : index
    %c0_20 = arith.constant 0 : index
    %c0_21 = arith.constant 0 : index
    %17 = vector.load %arg3[%c1_19, %c0_20, %c0_21] : memref<3x32x24xbf16, #tpu.memory_space<vmem>>, vector<1x32x24xbf16>
    %18 = vector.shape_cast %17 : vector<1x32x24xbf16> to vector<32x24xbf16>
    %cst_22 = arith.constant dense<0.000000e+00> : vector<32x256xf32>
    %19 = tpu.matmul %18, %16, %cst_22 {dimension_numbers = #tpu.dot_dimension_numbers<[1], [1], [0], [0], [0, 0, 1, 0], [], []>} : vector<32x24xbf16>, vector<256x24xbf16>, vector<32x256xf32> -> vector<32x256xf32>
    %20 = arith.addf %14, %19 : vector<32x256xf32>
    %c0_23 = arith.constant 0 : index
    %c48 = arith.constant 48 : index
    %c0_24 = arith.constant 0 : index
    %21 = vector.load %arg1[%c0_23, %c48, %c0_24] : memref<1x320x24xbf16, #tpu.memory_space<vmem>>, vector<1x256x24xbf16>
    %22 = vector.shape_cast %21 : vector<1x256x24xbf16> to vector<256x24xbf16>
    %c2 = arith.constant 2 : index
    %c0_25 = arith.constant 0 : index
    %c0_26 = arith.constant 0 : index
    %23 = vector.load %arg3[%c2, %c0_25, %c0_26] : memref<3x32x24xbf16, #tpu.memory_space<vmem>>, vector<1x32x24xbf16>
    %24 = vector.shape_cast %23 : vector<1x32x24xbf16> to vector<32x24xbf16>
    %cst_27 = arith.constant dense<0.000000e+00> : vector<32x256xf32>
    %25 = tpu.matmul %24, %22, %cst_27 {dimension_numbers = #tpu.dot_dimension_numbers<[1], [1], [0], [0], [0, 0, 1, 0], [], []>} : vector<32x24xbf16>, vector<256x24xbf16>, vector<32x256xf32> -> vector<32x256xf32>
    %26 = arith.addf %20, %25 : vector<32x256xf32>
    %cst_28 = arith.constant dense<0.000000e+00> : vector<32xf32>
    %27 = vector.multi_reduction <add>, %26, %cst_28 [1] : vector<32x256xf32> to vector<32xf32>
    %28 = vector.shape_cast %27 : vector<32xf32> to vector<32x1xf32>
    %cst_29 = arith.constant 2.560000e+02 : f32
    %29 = vector.broadcast %cst_29 : f32 to vector<32x1xf32>
    %30 = arith.divf %28, %29 : vector<32x1xf32>
    %31 = arith.mulf %26, %26 : vector<32x256xf32>
    %cst_30 = arith.constant dense<0.000000e+00> : vector<32xf32>
    %32 = vector.multi_reduction <add>, %31, %cst_30 [1] : vector<32x256xf32> to vector<32xf32>
    %33 = vector.shape_cast %32 : vector<32xf32> to vector<32x1xf32>
    %cst_31 = arith.constant 2.560000e+02 : f32
    %34 = vector.broadcast %cst_31 : f32 to vector<32x1xf32>
    %35 = arith.divf %33, %34 : vector<32x1xf32>
    %36 = arith.mulf %30, %30 : vector<32x1xf32>
    %37 = arith.subf %35, %36 : vector<32x1xf32>
    %38 = vector.broadcast %30 : vector<32x1xf32> to vector<32x256xf32>
    %39 = arith.subf %26, %38 : vector<32x256xf32>
    %cst_32 = arith.constant 9.99999974E-6 : f32
    %40 = vector.broadcast %cst_32 : f32 to vector<32x1xf32>
    %41 = arith.addf %37, %40 : vector<32x1xf32>
    %42 = math.rsqrt %41 : vector<32x1xf32>
    %43 = vector.broadcast %42 : vector<32x1xf32> to vector<32x256xf32>
    %44 = arith.mulf %39, %43 : vector<32x256xf32>
    %cst_33 = arith.constant 0.00999999977 : f32
    %45 = vector.broadcast %cst_33 : f32 to vector<32x256xf32>
    %46 = arith.mulf %45, %44 : vector<32x256xf32>
    %47 = arith.maximumf %44, %46 : vector<32x256xf32>
    %48 = tpu.transpose %47, [1, 0] : vector<32x256xf32> -> vector<256x32xf32>
    %c32_34 = arith.constant 32 : index
    %c0_35 = arith.constant 0 : index
    %49 = vector.load %arg10[%c32_34, %c0_35] : memref<320x32xf32, #tpu.memory_space<vmem>>, vector<256x32xf32>
    tpu.vector_store %arg10[%c32_34, %c0_35], %48 {strides = array<i32>} : memref<320x32xf32, #tpu.memory_space<vmem>>, vector<256x32xf32>,
    %cst_36 = arith.constant 0.000000e+00 : f32
    %50 = vector.broadcast %cst_36 : f32 to vector<16x256xf32>
    %c15 = arith.constant 15 : index
    %c0_37 = arith.constant 0 : index
    %51 = vector.load %arg10[%c15, %c0_37] : memref<320x32xf32, #tpu.memory_space<vmem>>, vector<288x32xf32>
    %cst_38 = arith.constant 0.000000e+00 : f32
    %52 = vector.broadcast %cst_38 : f32 to vector<16x256xf32>
    %53 = vector.extract_strided_slice %51 {offsets = [0, 0], sizes = [256, 32], strides = [1, 1]} : vector<288x32xf32> to vector<256x32xf32>
    %c0_39 = arith.constant 0 : index
    %c0_40 = arith.constant 0 : index
    %c0_41 = arith.constant 0 : index
    %54 = vector.load %arg4[%c0_39, %c0_40, %c0_41] : memref<9x16x32xf32, #tpu.memory_space<vmem>>, vector<1x16x32xf32>
    %55 = vector.shape_cast %54 : vector<1x16x32xf32> to vector<16x32xf32>
    %cst_42 = arith.constant dense<0.000000e+00> : vector<16x256xf32>
    %56 = tpu.matmul %55, %53, %cst_42 {dimension_numbers = #tpu.dot_dimension_numbers<[1], [1], [0], [0], [0, 0, 1, 0], [], []>} : vector<16x32xf32>, vector<256x32xf32>, vector<16x256xf32> -> vector<16x256xf32>
    %57 = arith.addf %52, %56 : vector<16x256xf32>
    %58 = vector.extract_strided_slice %51 {offsets = [16, 0], sizes = [256, 32], strides = [1, 1]} : vector<288x32xf32> to vector<256x32xf32>
    %c3 = arith.constant 3 : index
    %c0_43 = arith.constant 0 : index
    %c0_44 = arith.constant 0 : index
    %59 = vector.load %arg4[%c3, %c0_43, %c0_44] : memref<9x16x32xf32, #tpu.memory_space<vmem>>, vector<1x16x32xf32>
    %60 = vector.shape_cast %59 : vector<1x16x32xf32> to vector<16x32xf32>
    %cst_45 = arith.constant dense<0.000000e+00> : vector<16x256xf32>
    %61 = tpu.matmul %60, %58, %cst_45 {dimension_numbers = #tpu.dot_dimension_numbers<[1], [1], [0], [0], [0, 0, 1, 0], [], []>} : vector<16x32xf32>, vector<256x32xf32>, vector<16x256xf32> -> vector<16x256xf32>
    %62 = arith.addf %57, %61 : vector<16x256xf32>
    %63 = vector.extract_strided_slice %51 {offsets = [32, 0], sizes = [256, 32], strides = [1, 1]} : vector<288x32xf32> to vector<256x32xf32>
    %c6 = arith.constant 6 : index
    %c0_46 = arith.constant 0 : index
    %c0_47 = arith.constant 0 : index
    %64 = vector.load %arg4[%c6, %c0_46, %c0_47] : memref<9x16x32xf32, #tpu.memory_space<vmem>>, vector<1x16x32xf32>
    %65 = vector.shape_cast %64 : vector<1x16x32xf32> to vector<16x32xf32>
    %cst_48 = arith.constant dense<0.000000e+00> : vector<16x256xf32>
    %66 = tpu.matmul %65, %63, %cst_48 {dimension_numbers = #tpu.dot_dimension_numbers<[1], [1], [0], [0], [0, 0, 1, 0], [], []>} : vector<16x32xf32>, vector<256x32xf32>, vector<16x256xf32> -> vector<16x256xf32>
    %67 = arith.addf %62, %66 : vector<16x256xf32>
    %68 = vector.broadcast %4 : vector<1x256xf32> to vector<16x256xf32>
    %69 = arith.mulf %67, %68 : vector<16x256xf32>
    %70 = arith.addf %50, %69 : vector<16x256xf32>
    %c16_49 = arith.constant 16 : index
    %c0_50 = arith.constant 0 : index
    %71 = vector.load %arg10[%c16_49, %c0_50] : memref<320x32xf32, #tpu.memory_space<vmem>>, vector<288x32xf32>
    %cst_51 = arith.constant 0.000000e+00 : f32
    %72 = vector.broadcast %cst_51 : f32 to vector<16x256xf32>
    %73 = vector.extract_strided_slice %71 {offsets = [0, 0], sizes = [256, 32], strides = [1, 1]} : vector<288x32xf32> to vector<256x32xf32>
    %c1_52 = arith.constant 1 : index
    %c0_53 = arith.constant 0 : index
    %c0_54 = arith.constant 0 : index
    %74 = vector.load %arg4[%c1_52, %c0_53, %c0_54] : memref<9x16x32xf32, #tpu.memory_space<vmem>>, vector<1x16x32xf32>
    %75 = vector.shape_cast %74 : vector<1x16x32xf32> to vector<16x32xf32>
    %cst_55 = arith.constant dense<0.000000e+00> : vector<16x256xf32>
    %76 = tpu.matmul %75, %73, %cst_55 {dimension_numbers = #tpu.dot_dimension_numbers<[1], [1], [0], [0], [0, 0, 1, 0], [], []>} : vector<16x32xf32>, vector<256x32xf32>, vector<16x256xf32> -> vector<16x256xf32>
    %77 = arith.addf %72, %76 : vector<16x256xf32>
    %78 = vector.extract_strided_slice %71 {offsets = [16, 0], sizes = [256, 32], strides = [1, 1]} : vector<288x32xf32> to vector<256x32xf32>
    %c4 = arith.constant 4 : index
    %c0_56 = arith.constant 0 : index
    %c0_57 = arith.constant 0 : index
    %79 = vector.load %arg4[%c4, %c0_56, %c0_57] : memref<9x16x32xf32, #tpu.memory_space<vmem>>, vector<1x16x32xf32>
    %80 = vector.shape_cast %79 : vector<1x16x32xf32> to vector<16x32xf32>
    %cst_58 = arith.constant dense<0.000000e+00> : vector<16x256xf32>
    %81 = tpu.matmul %80, %78, %cst_58 {dimension_numbers = #tpu.dot_dimension_numbers<[1], [1], [0], [0], [0, 0, 1, 0], [], []>} : vector<16x32xf32>, vector<256x32xf32>, vector<16x256xf32> -> vector<16x256xf32>
    %82 = arith.addf %77, %81 : vector<16x256xf32>
    %83 = vector.extract_strided_slice %71 {offsets = [32, 0], sizes = [256, 32], strides = [1, 1]} : vector<288x32xf32> to vector<256x32xf32>
    %c7 = arith.constant 7 : index
    %c0_59 = arith.constant 0 : index
    %c0_60 = arith.constant 0 : index
    %84 = vector.load %arg4[%c7, %c0_59, %c0_60] : memref<9x16x32xf32, #tpu.memory_space<vmem>>, vector<1x16x32xf32>
    %85 = vector.shape_cast %84 : vector<1x16x32xf32> to vector<16x32xf32>
    %cst_61 = arith.constant dense<0.000000e+00> : vector<16x256xf32>
    %86 = tpu.matmul %85, %83, %cst_61 {dimension_numbers = #tpu.dot_dimension_numbers<[1], [1], [0], [0], [0, 0, 1, 0], [], []>} : vector<16x32xf32>, vector<256x32xf32>, vector<16x256xf32> -> vector<16x256xf32>
    %87 = arith.addf %82, %86 : vector<16x256xf32>
    %88 = arith.addf %70, %87 : vector<16x256xf32>
    %c17 = arith.constant 17 : index
    %c0_62 = arith.constant 0 : index
    %89 = vector.load %arg10[%c17, %c0_62] : memref<320x32xf32, #tpu.memory_space<vmem>>, vector<288x32xf32>
    %cst_63 = arith.constant 0.000000e+00 : f32
    %90 = vector.broadcast %cst_63 : f32 to vector<16x256xf32>
    %91 = vector.extract_strided_slice %89 {offsets = [0, 0], sizes = [256, 32], strides = [1, 1]} : vector<288x32xf32> to vector<256x32xf32>
    %c2_64 = arith.constant 2 : index
    %c0_65 = arith.constant 0 : index
    %c0_66 = arith.constant 0 : index
    %92 = vector.load %arg4[%c2_64, %c0_65, %c0_66] : memref<9x16x32xf32, #tpu.memory_space<vmem>>, vector<1x16x32xf32>
    %93 = vector.shape_cast %92 : vector<1x16x32xf32> to vector<16x32xf32>
    %cst_67 = arith.constant dense<0.000000e+00> : vector<16x256xf32>
    %94 = tpu.matmul %93, %91, %cst_67 {dimension_numbers = #tpu.dot_dimension_numbers<[1], [1], [0], [0], [0, 0, 1, 0], [], []>} : vector<16x32xf32>, vector<256x32xf32>, vector<16x256xf32> -> vector<16x256xf32>
    %95 = arith.addf %90, %94 : vector<16x256xf32>
    %96 = vector.extract_strided_slice %89 {offsets = [16, 0], sizes = [256, 32], strides = [1, 1]} : vector<288x32xf32> to vector<256x32xf32>
    %c5 = arith.constant 5 : index
    %c0_68 = arith.constant 0 : index
    %c0_69 = arith.constant 0 : index
    %97 = vector.load %arg4[%c5, %c0_68, %c0_69] : memref<9x16x32xf32, #tpu.memory_space<vmem>>, vector<1x16x32xf32>
    %98 = vector.shape_cast %97 : vector<1x16x32xf32> to vector<16x32xf32>
    %cst_70 = arith.constant dense<0.000000e+00> : vector<16x256xf32>
    %99 = tpu.matmul %98, %96, %cst_70 {dimension_numbers = #tpu.dot_dimension_numbers<[1], [1], [0], [0], [0, 0, 1, 0], [], []>} : vector<16x32xf32>, vector<256x32xf32>, vector<16x256xf32> -> vector<16x256xf32>
    %100 = arith.addf %95, %99 : vector<16x256xf32>
    %101 = vector.extract_strided_slice %89 {offsets = [32, 0], sizes = [256, 32], strides = [1, 1]} : vector<288x32xf32> to vector<256x32xf32>
    %c8 = arith.constant 8 : index
    %c0_71 = arith.constant 0 : index
    %c0_72 = arith.constant 0 : index
    %102 = vector.load %arg4[%c8, %c0_71, %c0_72] : memref<9x16x32xf32, #tpu.memory_space<vmem>>, vector<1x16x32xf32>
    %103 = vector.shape_cast %102 : vector<1x16x32xf32> to vector<16x32xf32>
    %cst_73 = arith.constant dense<0.000000e+00> : vector<16x256xf32>
    %104 = tpu.matmul %103, %101, %cst_73 {dimension_numbers = #tpu.dot_dimension_numbers<[1], [1], [0], [0], [0, 0, 1, 0], [], []>} : vector<16x32xf32>, vector<256x32xf32>, vector<16x256xf32> -> vector<16x256xf32>
    %105 = arith.addf %100, %104 : vector<16x256xf32>
    %106 = vector.broadcast %5 : vector<1x256xf32> to vector<16x256xf32>
    %107 = arith.mulf %105, %106 : vector<16x256xf32>
    %108 = arith.addf %88, %107 : vector<16x256xf32>
    %cst_74 = arith.constant dense<0.000000e+00> : vector<16xf32>
    %109 = vector.multi_reduction <add>, %108, %cst_74 [1] : vector<16x256xf32> to vector<16xf32>
    %110 = vector.shape_cast %109 : vector<16xf32> to vector<16x1xf32>
    %cst_75 = arith.constant 2.560000e+02 : f32
    %111 = vector.broadcast %cst_75 : f32 to vector<16x1xf32>
    %112 = arith.divf %110, %111 : vector<16x1xf32>
    %113 = arith.mulf %108, %108 : vector<16x256xf32>
    %cst_76 = arith.constant dense<0.000000e+00> : vector<16xf32>
    %114 = vector.multi_reduction <add>, %113, %cst_76 [1] : vector<16x256xf32> to vector<16xf32>
    %115 = vector.shape_cast %114 : vector<16xf32> to vector<16x1xf32>
    %cst_77 = arith.constant 2.560000e+02 : f32
    %116 = vector.broadcast %cst_77 : f32 to vector<16x1xf32>
    %117 = arith.divf %115, %116 : vector<16x1xf32>
    %118 = arith.mulf %112, %112 : vector<16x1xf32>
    %119 = arith.subf %117, %118 : vector<16x1xf32>
    %120 = vector.broadcast %112 : vector<16x1xf32> to vector<16x256xf32>
    %121 = arith.subf %108, %120 : vector<16x256xf32>
    %cst_78 = arith.constant 9.99999974E-6 : f32
    %122 = vector.broadcast %cst_78 : f32 to vector<16x1xf32>
    %123 = arith.addf %119, %122 : vector<16x1xf32>
    %124 = math.rsqrt %123 : vector<16x1xf32>
    %125 = vector.broadcast %124 : vector<16x1xf32> to vector<16x256xf32>
    %126 = arith.mulf %121, %125 : vector<16x256xf32>
    %cst_79 = arith.constant 0.00999999977 : f32
    %127 = vector.broadcast %cst_79 : f32 to vector<16x256xf32>
    %128 = arith.mulf %127, %126 : vector<16x256xf32>
    %129 = arith.maximumf %126, %128 : vector<16x256xf32>
    %c0_80 = arith.constant 0 : index
    %c0_81 = arith.constant 0 : index
    %130 = vector.load %arg5[%c0_80, %c0_81] : memref<8x16xf32, #tpu.memory_space<vmem>>, vector<8x16xf32>
    %cst_82 = arith.constant dense<0.000000e+00> : vector<8x256xf32>
    %131 = tpu.matmul %130, %129, %cst_82 {dimension_numbers = #tpu.dot_dimension_numbers<[1], [0], [0], [1], [0, 0, 1, 1], [], []>} : vector<8x16xf32>, vector<16x256xf32>, vector<8x256xf32> -> vector<8x256xf32>
    %cst_83 = arith.constant dense<0.000000e+00> : vector<8xf32>
    %132 = vector.multi_reduction <add>, %131, %cst_83 [1] : vector<8x256xf32> to vector<8xf32>
    %133 = vector.shape_cast %132 : vector<8xf32> to vector<8x1xf32>
    %cst_84 = arith.constant 2.560000e+02 : f32
    %134 = vector.broadcast %cst_84 : f32 to vector<8x1xf32>
    %135 = arith.divf %133, %134 : vector<8x1xf32>
    %136 = arith.mulf %131, %131 : vector<8x256xf32>
    %cst_85 = arith.constant dense<0.000000e+00> : vector<8xf32>
    %137 = vector.multi_reduction <add>, %136, %cst_85 [1] : vector<8x256xf32> to vector<8xf32>
    %138 = vector.shape_cast %137 : vector<8xf32> to vector<8x1xf32>
    %cst_86 = arith.constant 2.560000e+02 : f32
    %139 = vector.broadcast %cst_86 : f32 to vector<8x1xf32>
    %140 = arith.divf %138, %139 : vector<8x1xf32>
    %141 = arith.mulf %135, %135 : vector<8x1xf32>
    %142 = arith.subf %140, %141 : vector<8x1xf32>
    %143 = vector.broadcast %135 : vector<8x1xf32> to vector<8x256xf32>
    %144 = arith.subf %131, %143 : vector<8x256xf32>
    %cst_87 = arith.constant 9.99999974E-6 : f32
    %145 = vector.broadcast %cst_87 : f32 to vector<8x1xf32>
    %146 = arith.addf %142, %145 : vector<8x1xf32>
    %147 = math.rsqrt %146 : vector<8x1xf32>
    %148 = vector.broadcast %147 : vector<8x1xf32> to vector<8x256xf32>
    %149 = arith.mulf %144, %148 : vector<8x256xf32>
    %cst_88 = arith.constant 0.00999999977 : f32
    %150 = vector.broadcast %cst_88 : f32 to vector<8x256xf32>
    %151 = arith.mulf %150, %149 : vector<8x256xf32>
    %152 = arith.maximumf %149, %151 : vector<8x256xf32>
    %c0_89 = arith.constant 0 : index
    %c0_90 = arith.constant 0 : index
    %153 = vector.load %arg6[%c0_89, %c0_90] : memref<2x8xf32, #tpu.memory_space<vmem>>, vector<2x8xf32>
    %cst_91 = arith.constant dense<0.000000e+00> : vector<2x256xf32>
    %154 = tpu.matmul %153, %152, %cst_91 {dimension_numbers = #tpu.dot_dimension_numbers<[1], [0], [0], [1], [0, 0, 1, 1], [], []>} : vector<2x8xf32>, vector<8x256xf32>, vector<2x256xf32> -> vector<2x256xf32>
    %155 = vector.broadcast %6 : vector<2x1xf32> to vector<2x256xf32>
    %156 = arith.addf %154, %155 : vector<2x256xf32>
    %157 = arith.addf %156, %7 : vector<2x256xf32>
    %c0_92 = arith.constant 0 : index
    %c0_93 = arith.constant 0 : index
    %c0_94 = arith.constant 0 : index
    %158 = vector.load %arg9[%c0_92, %c0_93, %c0_94] : memref<1x2x256xf32, #tpu.memory_space<vmem>>, vector<1x2x256xf32>
    %159 = vector.shape_cast %158 : vector<1x2x256xf32> to vector<2x256xf32>
    %160 = vector.shape_cast %157 : vector<2x256xf32> to vector<1x2x256xf32>
    tpu.vector_store %arg9[%c0_92, %c0_93, %c0_94], %160 {strides = array<i32>} : memref<1x2x256xf32, #tpu.memory_space<vmem>>, vector<1x2x256xf32>,
    return
  }
  func.func @transform_0(%arg0: i32) -> (i32, i32, i32) {
    %c0_i32 = arith.constant 0 : i32
    %c0_i32_0 = arith.constant 0 : i32
    %c0_i32_1 = arith.constant 0 : i32
    return %arg0, %c0_i32, %c0_i32_0 : i32, i32, i32
  }
  func.func @transform_1(%arg0: i32) -> (i32, i32) {
    %c0_i32 = arith.constant 0 : i32
    %c0_i32_0 = arith.constant 0 : i32
    %c0_i32_1 = arith.constant 0 : i32
    return %c0_i32, %c0_i32_0 : i32, i32
  }
  func.func @transform_2(%arg0: i32) -> (i32, i32, i32) {
    %c0_i32 = arith.constant 0 : i32
    %c0_i32_0 = arith.constant 0 : i32
    %c0_i32_1 = arith.constant 0 : i32
    %c0_i32_2 = arith.constant 0 : i32
    return %c0_i32, %c0_i32_0, %c0_i32_1 : i32, i32, i32
  }
  func.func @transform_3(%arg0: i32) -> (i32, i32, i32) {
    %c0_i32 = arith.constant 0 : i32
    %c0_i32_0 = arith.constant 0 : i32
    %c0_i32_1 = arith.constant 0 : i32
    %c0_i32_2 = arith.constant 0 : i32
    return %c0_i32, %c0_i32_0, %c0_i32_1 : i32, i32, i32
  }
  func.func @transform_4(%arg0: i32) -> (i32, i32) {
    %c0_i32 = arith.constant 0 : i32
    %c0_i32_0 = arith.constant 0 : i32
    %c0_i32_1 = arith.constant 0 : i32
    return %c0_i32, %c0_i32_0 : i32, i32
  }
  func.func @transform_5(%arg0: i32) -> (i32, i32) {
    %c0_i32 = arith.constant 0 : i32
    %c0_i32_0 = arith.constant 0 : i32
    %c0_i32_1 = arith.constant 0 : i32
    return %c0_i32, %c0_i32_0 : i32, i32
  }
  func.func @transform_6(%arg0: i32) -> (i32, i32) {
    %c0_i32 = arith.constant 0 : i32
    %c0_i32_0 = arith.constant 0 : i32
    %c0_i32_1 = arith.constant 0 : i32
    return %c0_i32, %c0_i32_0 : i32, i32
  }
  func.func @transform_7(%arg0: i32) -> (i32, i32) {
    %c0_i32 = arith.constant 0 : i32
    %c0_i32_0 = arith.constant 0 : i32
    %c0_i32_1 = arith.constant 0 : i32
    return %c0_i32, %c0_i32_0 : i32, i32
  }
  func.func @transform_8(%arg0: i32) -> (i32, i32, i32) {
    %c0_i32 = arith.constant 0 : i32
    %c0_i32_0 = arith.constant 0 : i32
    %c0_i32_1 = arith.constant 0 : i32
    return %arg0, %c0_i32, %c0_i32_0 : i32, i32, i32
  }
}

</mosaic_0001>

<llo_original>
// kernel: tpu_custom_call.1
$region0: #{tpu_custom_call.1}
  #allocation0 [shape = 'u32[]', space=smem, size = 0x4, offset = 0x4, fixed_abs, tag = 'smem constant byte address 0x4 - core index']
  #allocation1 [shape = 'u32[144,128]{1,0:T(1,128)}', space=vmem, size = 0x12000, scoped, tag = 'internal scratch']
  #allocation2 [shape = 'f32[320,32]{1,0:T(8,128)}', space=vmem, size = 0x28000, scoped, tag = 'scratch operand']
  %s0 = inlined_call_operand.vmem [shape: bf16[2,320,24], index: 0, kind: input, shape index: {}]
  %s1 = inlined_call_operand.vmem [shape: f32[2,256], index: 1, kind: input, shape index: {}]
  %s2 = inlined_call_operand.vmem [shape: bf16[3,32,24], index: 2, kind: input, shape index: {}]
  %s3 = inlined_call_operand.vmem [shape: f32[9,16,32], index: 3, kind: input, shape index: {}]
  %s4 = inlined_call_operand.vmem [shape: f32[8,16], index: 4, kind: input, shape index: {}]
  %s5 = inlined_call_operand.vmem [shape: f32[2,8], index: 5, kind: input, shape index: {}]
  %s6 = inlined_call_operand.vmem [shape: f32[2,1], index: 6, kind: input, shape index: {}]
  %s7 = inlined_call_operand.vmem [shape: f32[2,256], index: 7, kind: input, shape index: {}]
  %s8 = inlined_call_operand.hbm [shape: f32[2,2,256], index: 8, kind: output, shape index: {}]
  %s9 = sld [smem:[#allocation0]]
  $region65: #{tpu_custom_call.1} parent=0
    _
  %s11 = ssub.s32 1, %s9
  %s12 = scalar_select 0, %s11, %s9
  $region1: #{tpu_custom_call.1} parent=0
    #allocation3 [shape = 'u8[4096]{0}', space=vmem, size = 0x1000, scoped, tag = 'output window, operand 0']
    #allocation4 [shape = 's32[2]{0}', space=sflag, size = 0x8, scoped, tag = 'scoped memory for tpu_custom_call.1']
    %13 = vsyncpa [#allocation4], 0
    %s14 = scalar_lea.sflag [#allocation4], 1
    %15 = vsyncpa %s14, 0
    loop: start=0, step=1, limit=4
    $region2: #{tpu_custom_call.1} parent=1 // loop_pre_header
      _
    $region3: #{tpu_custom_call.1} parent=1 // loop_header
      %s17 = sphi 0, %s21
      %p18 = scmp.ge.s32.totalorder %s17, 4
      %s27 = sphi 0, %s29
      %s30 = sphi 0, %s27
      %s31 = sphi 0, %s30
      %s47 = sphi 0, %s31
      %s51 = sphi 0, %s51
      %s53 = sphi 0, %s51
      %s54 = sphi 0, %s53
      %s68 = sphi 0, %s54
      %s72 = sphi 0, %s72
      %s74 = sphi 0, %s72
      %s75 = sphi 0, %s74
      %s89 = sphi 0, %s75
      %s93 = sphi 0, %s93
      %s95 = sphi 0, %s93
      %s96 = sphi 0, %s95
      %s110 = sphi 0, %s96
      %s114 = sphi 0, %s114
      %s116 = sphi 0, %s114
      %s117 = sphi 0, %s116
      %s131 = sphi 0, %s117
      %s135 = sphi 0, %s135
      %s137 = sphi 0, %s135
      %s138 = sphi 0, %s137
      %s152 = sphi 0, %s138
      %s156 = sphi 0, %s156
      %s158 = sphi 0, %s156
      %s159 = sphi 0, %s158
      %s173 = sphi 0, %s159
      %s177 = sphi 0, %s177
      %s179 = sphi 0, %s177
      %s180 = sphi 0, %s179
      %s194 = sphi 0, %s180
      %s200 = sphi 0, %s202
      %s203 = sphi 0, %s200
      %s204 = sphi 0, %s203
      %s220 = sphi 0, %s204
    $region4: #{tpu_custom_call.1} parent=1 // loop_header_branch
      %20 = sbr.rel (%p18) target = $region8
    $region5: #{tpu_custom_call.1} parent=1 // loop_body
      %s22 = ssub.s32 %s17, 1
      %s23 = ssub.s32 %s17, 2
      %s24 = sadd.s32 %s17, 1
      %s25 = ssub.s32 %s17, %s24
      %p26 = scmp.eq.s32.totalorder %s25, 0
      %s28 = sadd.s32 %s27, 1
      %s29 = scalar_select %p26, %s27, %s28
      %p32 = pneg %p26
      %p33 = scmp.eq.s32.totalorder %s17, 1
      %p34 = por %p32, %p33
      %p35 = scmp.ne.s32.totalorder %s27, %s30
      %p36 = scmp.eq.s32.totalorder %s17, 0
      %p37 = por %p35, %p36
      %p38 = scmp.ne.s32.totalorder %s27, %s30
      %p39 = scmp.eq.s32.totalorder %s22, 1
      %p40 = por %p38, %p39
      %p41 = scmp.ne.s32.totalorder %s30, %s31
      %p42 = scmp.eq.s32.totalorder %s22, 0
      %p43 = por %p41, %p42
      %p44 = scmp.ne.s32.totalorder %s30, %s31
      %p45 = scmp.eq.s32.totalorder %s23, 1
      %p46 = por %p44, %p45
      %p48 = scmp.ne.s32.totalorder %s31, %s47
      %p49 = scmp.eq.s32.totalorder %s23, 0
      %p50 = por %p48, %p49
      %s52 = sadd.s32 %s51, 1
      %p55 = scmp.eq.s32.totalorder %s17, 1
      %p56 = scmp.ne.s32.totalorder %s51, %s53
      %p57 = scmp.eq.s32.totalorder %s17, 0
      %p58 = por %p56, %p57
      %p59 = scmp.ne.s32.totalorder %s51, %s53
      %p60 = scmp.eq.s32.totalorder %s22, 1
      %p61 = por %p59, %p60
      %p62 = scmp.ne.s32.totalorder %s53, %s54
      %p63 = scmp.eq.s32.totalorder %s22, 0
      %p64 = por %p62, %p63
      %p65 = scmp.ne.s32.totalorder %s53, %s54
      %p66 = scmp.eq.s32.totalorder %s23, 1
      %p67 = por %p65, %p66
      %p69 = scmp.ne.s32.totalorder %s54, %s68
      %p70 = scmp.eq.s32.totalorder %s23, 0
      %p71 = por %p69, %p70
      %s73 = sadd.s32 %s72, 1
      %p76 = scmp.eq.s32.totalorder %s17, 1
      %p77 = scmp.ne.s32.totalorder %s72, %s74
      %p78 = scmp.eq.s32.totalorder %s17, 0
      %p79 = por %p77, %p78
      %p80 = scmp.ne.s32.totalorder %s72, %s74
      %p81 = scmp.eq.s32.totalorder %s22, 1
      %p82 = por %p80, %p81
      %p83 = scmp.ne.s32.totalorder %s74, %s75
      %p84 = scmp.eq.s32.totalorder %s22, 0
      %p85 = por %p83, %p84
      %p86 = scmp.ne.s32.totalorder %s74, %s75
      %p87 = scmp.eq.s32.totalorder %s23, 1
      %p88 = por %p86, %p87
      %p90 = scmp.ne.s32.totalorder %s75, %s89
      %p91 = scmp.eq.s32.totalorder %s23, 0
      %p92 = por %p90, %p91
      %s94 = sadd.s32 %s93, 1
      %p97 = scmp.eq.s32.totalorder %s17, 1
      %p98 = scmp.ne.s32.totalorder %s93, %s95
      %p99 = scmp.eq.s32.totalorder %s17, 0
      %p100 = por %p98, %p99
      %p101 = scmp.ne.s32.totalorder %s93, %s95
      %p102 = scmp.eq.s32.totalorder %s22, 1
      %p103 = por %p101, %p102
      %p104 = scmp.ne.s32.totalorder %s95, %s96
      %p105 = scmp.eq.s32.totalorder %s22, 0
      %p106 = por %p104, %p105
      %p107 = scmp.ne.s32.totalorder %s95, %s96
      %p108 = scmp.eq.s32.totalorder %s23, 1
      %p109 = por %p107, %p108
      %p111 = scmp.ne.s32.totalorder %s96, %s110
      %p112 = scmp.eq.s32.totalorder %s23, 0
      %p113 = por %p111, %p112
      %s115 = sadd.s32 %s114, 1
      %p118 = scmp.eq.s32.totalorder %s17, 1
      %p119 = scmp.ne.s32.totalorder %s114, %s116
      %p120 = scmp.eq.s32.totalorder %s17, 0
      %p121 = por %p119, %p120
      %p122 = scmp.ne.s32.totalorder %s114, %s116
      %p123 = scmp.eq.s32.totalorder %s22, 1
      %p124 = por %p122, %p123
      %p125 = scmp.ne.s32.totalorder %s116, %s117
      %p126 = scmp.eq.s32.totalorder %s22, 0
      %p127 = por %p125, %p126
      %p128 = scmp.ne.s32.totalorder %s116, %s117
      %p129 = scmp.eq.s32.totalorder %s23, 1
      %p130 = por %p128, %p129
      %p132 = scmp.ne.s32.totalorder %s117, %s131
      %p133 = scmp.eq.s32.totalorder %s23, 0
      %p134 = por %p132, %p133
      %s136 = sadd.s32 %s135, 1
      %p139 = scmp.eq.s32.totalorder %s17, 1
      %p140 = scmp.ne.s32.totalorder %s135, %s137
      %p141 = scmp.eq.s32.totalorder %s17, 0
      %p142 = por %p140, %p141
      %p143 = scmp.ne.s32.totalorder %s135, %s137
      %p144 = scmp.eq.s32.totalorder %s22, 1
      %p145 = por %p143, %p144
      %p146 = scmp.ne.s32.totalorder %s137, %s138
      %p147 = scmp.eq.s32.totalorder %s22, 0
      %p148 = por %p146, %p147
      %p149 = scmp.ne.s32.totalorder %s137, %s138
      %p150 = scmp.eq.s32.totalorder %s23, 1
      %p151 = por %p149, %p150
      %p153 = scmp.ne.s32.totalorder %s138, %s152
      %p154 = scmp.eq.s32.totalorder %s23, 0
      %p155 = por %p153, %p154
      %s157 = sadd.s32 %s156, 1
      %p160 = scmp.eq.s32.totalorder %s17, 1
      %p161 = scmp.ne.s32.totalorder %s156, %s158
      %p162 = scmp.eq.s32.totalorder %s17, 0
      %p163 = por %p161, %p162
      %p164 = scmp.ne.s32.totalorder %s156, %s158
      %p165 = scmp.eq.s32.totalorder %s22, 1
      %p166 = por %p164, %p165
      %p167 = scmp.ne.s32.totalorder %s158, %s159
      %p168 = scmp.eq.s32.totalorder %s22, 0
      %p169 = por %p167, %p168
      %p170 = scmp.ne.s32.totalorder %s158, %s159
      %p171 = scmp.eq.s32.totalorder %s23, 1
      %p172 = por %p170, %p171
      %p174 = scmp.ne.s32.totalorder %s159, %s173
      %p175 = scmp.eq.s32.totalorder %s23, 0
      %p176 = por %p174, %p175
      %s178 = sadd.s32 %s177, 1
      %p181 = scmp.eq.s32.totalorder %s17, 1
      %p182 = scmp.ne.s32.totalorder %s177, %s179
      %p183 = scmp.eq.s32.totalorder %s17, 0
      %p184 = por %p182, %p183
      %p185 = scmp.ne.s32.totalorder %s177, %s179
      %p186 = scmp.eq.s32.totalorder %s22, 1
      %p187 = por %p185, %p186
      %p188 = scmp.ne.s32.totalorder %s179, %s180
      %p189 = scmp.eq.s32.totalorder %s22, 0
      %p190 = por %p188, %p189
      %p191 = scmp.ne.s32.totalorder %s179, %s180
      %p192 = scmp.eq.s32.totalorder %s23, 1
      %p193 = por %p191, %p192
      %p195 = scmp.ne.s32.totalorder %s180, %s194
      %p196 = scmp.eq.s32.totalorder %s23, 0
      %p197 = por %p195, %p196
      %s198 = ssub.s32 %s17, %s24
      %p199 = scmp.eq.s32.totalorder %s198, 0
      %s201 = sadd.s32 %s200, 1
      %s202 = scalar_select %p199, %s200, %s201
      %p205 = pneg %p199
      %p206 = scmp.eq.s32.totalorder %s17, 1
      %p207 = por %p205, %p206
      %p208 = scmp.ne.s32.totalorder %s200, %s203
      %p209 = scmp.eq.s32.totalorder %s17, 0
      %p210 = por %p208, %p209
      %p211 = scmp.ne.s32.totalorder %s200, %s203
      %p212 = scmp.eq.s32.totalorder %s22, 1
      %p213 = por %p211, %p212
      %p214 = scmp.ne.s32.totalorder %s203, %s204
      %p215 = scmp.eq.s32.totalorder %s22, 0
      %p216 = por %p214, %p215
      %p217 = scmp.ne.s32.totalorder %s203, %s204
      %p218 = scmp.eq.s32.totalorder %s23, 1
      %p219 = por %p217, %p218
      %p221 = scmp.ne.s32.totalorder %s204, %s220
      %p222 = scmp.eq.s32.totalorder %s23, 0
      %p223 = por %p221, %p222
      %p224 = scmp.le.s32.totalorder 1, %s17
      %p225 = scmp.lt.s32.totalorder %s17, 3
      %p226 = pnand %p224, %p225
      %p227 = pneg %p226
      // Predicated region
      $region9: #{tpu_custom_call.1} parent=5 // pred_check
        _
      $region10: #{tpu_custom_call.1} parent=5 // pred_check_branch
        %229 = sbr.rel (%p226) target = $region12
      $region11: #{tpu_custom_call.1} parent=5 // pred_region
        %s230 = ssub.s32 %s17, 1
        // Predicated region
        $region13: #{tpu_custom_call.1} parent=11 // pred_check
          %p231 = pneg %p64
        $region14: #{tpu_custom_call.1} parent=11 // pred_check_branch
          %233 = sbr.rel (%p231) target = $region16
        $region15: #{tpu_custom_call.1} parent=11 // pred_region
          _
        $region16: #{tpu_custom_call.1} parent=11 // pred_fallthru
          _
        // Predicated region
        $region17: #{tpu_custom_call.1} parent=11 // pred_check
          %p234 = pneg %p85
        $region18: #{tpu_custom_call.1} parent=11 // pred_check_branch
          %236 = sbr.rel (%p234) target = $region20
        $region19: #{tpu_custom_call.1} parent=11 // pred_region
          _
        $region20: #{tpu_custom_call.1} parent=11 // pred_fallthru
          _
        // Predicated region
        $region21: #{tpu_custom_call.1} parent=11 // pred_check
          %p237 = pneg %p106
        $region22: #{tpu_custom_call.1} parent=11 // pred_check_branch
          %239 = sbr.rel (%p237) target = $region24
        $region23: #{tpu_custom_call.1} parent=11 // pred_region
          _
        $region24: #{tpu_custom_call.1} parent=11 // pred_fallthru
          _
        // Predicated region
        $region25: #{tpu_custom_call.1} parent=11 // pred_check
          %p240 = pneg %p127
        $region26: #{tpu_custom_call.1} parent=11 // pred_check_branch
          %242 = sbr.rel (%p240) target = $region28
        $region27: #{tpu_custom_call.1} parent=11 // pred_region
          _
        $region28: #{tpu_custom_call.1} parent=11 // pred_fallthru
          _
        // Predicated region
        $region29: #{tpu_custom_call.1} parent=11 // pred_check
          %p243 = pneg %p148
        $region30: #{tpu_custom_call.1} parent=11 // pred_check_branch
          %245 = sbr.rel (%p243) target = $region32
        $region31: #{tpu_custom_call.1} parent=11 // pred_region
          _
        $region32: #{tpu_custom_call.1} parent=11 // pred_fallthru
          _
        // Predicated region
        $region33: #{tpu_custom_call.1} parent=11 // pred_check
          %p246 = pneg %p169
        $region34: #{tpu_custom_call.1} parent=11 // pred_check_branch
          %248 = sbr.rel (%p246) target = $region36
        $region35: #{tpu_custom_call.1} parent=11 // pred_region
          _
        $region36: #{tpu_custom_call.1} parent=11 // pred_fallthru
          _
        // Predicated region
        $region37: #{tpu_custom_call.1} parent=11 // pred_check
          %p249 = pneg %p190
        $region38: #{tpu_custom_call.1} parent=11 // pred_check_branch
          %251 = sbr.rel (%p249) target = $region40
        $region39: #{tpu_custom_call.1} parent=11 // pred_region
          _
        $region40: #{tpu_custom_call.1} parent=11 // pred_fallthru
          _
      $region12: #{tpu_custom_call.1} parent=5 // pred_fallthru
        _
      %p252 = scmp.lt.s32.totalorder %s17, 2
      // Predicated region
      $region41: #{tpu_custom_call.1} parent=5 // pred_check
        %p253 = pneg %p252
      $region42: #{tpu_custom_call.1} parent=5 // pred_check_branch
        %255 = sbr.rel (%p253) target = $region44
      $region43: #{tpu_custom_call.1} parent=5 // pred_region
        // Predicated region
        $region45: #{tpu_custom_call.1} parent=43 // pred_check
          %p256 = pneg %p37
        $region46: #{tpu_custom_call.1} parent=43 // pred_check_branch
          %258 = sbr.rel (%p256) target = $region48
        $region47: #{tpu_custom_call.1} parent=43 // pred_region
          %p259 = scmp.lt.s32.totalorder %s17, 1
          %s260 = scalar_select %p259, %s17, 1
          %s261 = smul.addr %s260, 40
          %s262 = smul.addr %s261, 4
          %s263 = scalar_lea.vmem %s0, %s262
        $region48: #{tpu_custom_call.1} parent=43 // pred_fallthru
          _
      $region44: #{tpu_custom_call.1} parent=5 // pred_fallthru
        _
      %p264 = scmp.le.s32.totalorder 1, %s17
      %p265 = scmp.lt.s32.totalorder %s17, 3
      %p266 = pnand %p264, %p265
      %p267 = pneg %p266
      // Predicated region
      $region49: #{tpu_custom_call.1} parent=5 // pred_check
        _
      $region50: #{tpu_custom_call.1} parent=5 // pred_check_branch
        %269 = sbr.rel (%p266) target = $region52
      $region51: #{tpu_custom_call.1} parent=5 // pred_region
        %s270 = ssub.s32 %s17, 1
        %p271 = scmp.lt.s32.totalorder %s22, 1
        %s272 = scalar_select %p271, %s22, 1
        %s273 = smul.addr %s272, 40
        %s274 = smul.addr %s273, 4
        %s275 = scalar_lea.vmem %s0, %s274
        %p276 = pneg %p43
        %p277 = pneg %p40
        %p278 = pneg %p64
        %p279 = pneg %p61
        %p280 = pneg %p85
        %p281 = pneg %p82
        %p282 = pneg %p106
        %p283 = pneg %p103
        %p284 = pneg %p127
        %p285 = pneg %p124
        %p286 = pneg %p148
        %p287 = pneg %p145
        %p288 = pneg %p169
        %p289 = pneg %p166
        %p290 = pneg %p190
        %p291 = pneg %p187
        %p292 = pneg %p216
        %p293 = pneg %p213
        %s294 = sand.u32 %s203, 1
        %s295 = scalar_lea.sflag [#allocation4], %s294
        %s296 = sand.u32 %s203, 1
        %s297 = smul.addr %s296, 4
        %s298 = scalar_lea.vmem [#allocation3], %s297
        %p299 = scmp.lt.s32.totalorder %s22, 1
        %s300 = scalar_select %p299, %s22, 1
        %s301 = smul.addr %s300, 40
        %s302 = smul.addr %s301, 4
        %s303 = scalar_lea.vmem %s0, %s302
        %vm305 = vcmask 261120
        %306 = vst.msk [vmem:[#allocation2] sm:$0xff] %vm305, 0.0
        %307 = vst.msk [vmem:[#allocation2 + $0x8] sm:$0xff] %vm305, 0.0
        %308 = vst.msk [vmem:[#allocation2 + $0x10] sm:$0xff] %vm305, 0.0
        %309 = vst.msk [vmem:[#allocation2 + $0x18] sm:$0xff] %vm305, 0.0
        %310 = vst.msk [vmem:[#allocation2 + $0x120] sm:$0xff] %vm305, 0.0
        %311 = vst.msk [vmem:[#allocation2 + $0x128] sm:$0xff] %vm305, 0.0
        %312 = vst.msk [vmem:[#allocation2 + $0x130] sm:$0xff] %vm305, 0.0
        %313 = vst.msk [vmem:[#allocation2 + $0x138] sm:$0xff] %vm305, 0.0
        %v314 = vld [vmem:[%s1] ss:$2 sm:$0x3]
        %s315 = scalar_lea.vmem %s1, 1
        %v316 = vld [vmem:[%s315] ss:$2 sm:$0x3]
        %v317 = vld [vmem:[%s6] sm:$0x3]
        %v318 = vld [vmem:[%s7] sm:$0xf]
        %v319 = vld [vmem:[%s303 + $0x8] sm:$0xf]
        %v320 = vld [vmem:[%s303 + $0xc] sm:$0xf]
        %v321 = vld [vmem:[%s303 + $0x10] sm:$0xf]
        %v322 = vld [vmem:[%s303 + $0x14] sm:$0xf]
        %v323 = vld [vmem:[%s303 + $0x18] sm:$0xf]
        %v324 = vld [vmem:[%s303 + $0x1c] sm:$0xf]
        %v325 = vld [vmem:[%s303 + $0x20] sm:$0xf]
        %v326 = vld [vmem:[%s303 + $0x24] sm:$0xf]
        %v327 = vld [vmem:[%s303 + $0x28] sm:$0xf]
        %v328 = vld [vmem:[%s303 + $0x2c] sm:$0xf]
        %v329 = vld [vmem:[%s303 + $0x30] sm:$0xf]
        %v330 = vld [vmem:[%s303 + $0x34] sm:$0xf]
        %v331 = vld [vmem:[%s303 + $0x38] sm:$0xf]
        %v332 = vld [vmem:[%s303 + $0x3c] sm:$0xf]
        %v333 = vld [vmem:[%s303 + $0x40] sm:$0xf]
        %v334 = vld [vmem:[%s303 + $0x44] sm:$0xf]
        %v335 = vld [vmem:[%s303 + $0x48] sm:$0xf]
        %v336 = vld [vmem:[%s303 + $0x4c] sm:$0xf]
        %v337 = vld [vmem:[%s303 + $0x50] sm:$0xf]
        %v338 = vld [vmem:[%s303 + $0x54] sm:$0xf]
        %v339 = vld [vmem:[%s303 + $0x58] sm:$0xf]
        %v340 = vld [vmem:[%s303 + $0x5c] sm:$0xf]
        %v341 = vld [vmem:[%s303 + $0x60] sm:$0xf]
        %v342 = vld [vmem:[%s303 + $0x64] sm:$0xf]
        %v343 = vld [vmem:[%s303 + $0x68] sm:$0xf]
        %v344 = vld [vmem:[%s303 + $0x6c] sm:$0xf]
        %v345 = vld [vmem:[%s303 + $0x70] sm:$0xf]
        %v346 = vld [vmem:[%s303 + $0x74] sm:$0xf]
        %v347 = vld [vmem:[%s303 + $0x78] sm:$0xf]
        %v348 = vld [vmem:[%s303 + $0x7c] sm:$0xf]
        %v349 = vld [vmem:[%s303 + $0x80] sm:$0xf]
        %v350 = vld [vmem:[%s303 + $0x84] sm:$0xf]
        %v351 = vld [vmem:[%s2] sm:$0xf]
        %v352 = vld [vmem:[%s2 + $0x4] sm:$0xf]
        %v353 = vld [vmem:[%s2 + $0x8] sm:$0xf]
        %v354 = vld [vmem:[%s2 + $0xc] sm:$0xf]
        %v355 = vld [vmem:[%s303 + $0x88] sm:$0xf]
        %v356 = vld [vmem:[%s303 + $0x8c] sm:$0xf]
        %s357 = scalar_lea.vmem %s2, 16
        %v358 = vld [vmem:[%s357] sm:$0xf]
        %v359 = vld [vmem:[%s357 + $0x4] sm:$0xf]
        %v360 = vld [vmem:[%s357 + $0x8] sm:$0xf]
        %v361 = vld [vmem:[%s357 + $0xc] sm:$0xf]
        %v366 = vunpack.c.l.b16 %v358
        %v367 = vunpack.c.l.b16 %v359
        %v368 = vunpack.c.l.b16 %v360
        %v369 = vunpack.c.l.b16 %v361
        %v370 = vpack.c.b16 %v367, %v366
        %v371 = vpack.c.b16 %v369, %v368
        %v404 = vunpack.c.l.b16 %v321
        %v405 = vunpack.c.l.b16 %v322
        %v406 = vunpack.c.l.b16 %v323
        %v407 = vunpack.c.l.b16 %v324
        %v408 = vunpack.c.l.b16 %v325
        %v409 = vunpack.c.l.b16 %v326
        %v410 = vunpack.c.l.b16 %v327
        %v411 = vunpack.c.l.b16 %v328
        %v412 = vunpack.c.l.b16 %v329
        %v413 = vunpack.c.l.b16 %v330
        %v414 = vunpack.c.l.b16 %v331
        %v415 = vunpack.c.l.b16 %v332
        %v416 = vunpack.c.l.b16 %v333
        %v417 = vunpack.c.l.b16 %v334
        %v418 = vunpack.c.l.b16 %v335
        %v419 = vunpack.c.l.b16 %v336
        %v420 = vunpack.c.l.b16 %v337
        %v421 = vunpack.c.l.b16 %v338
        %v422 = vunpack.c.l.b16 %v339
        %v423 = vunpack.c.l.b16 %v340
        %v424 = vunpack.c.l.b16 %v341
        %v425 = vunpack.c.l.b16 %v342
        %v426 = vunpack.c.l.b16 %v343
        %v427 = vunpack.c.l.b16 %v344
        %v428 = vunpack.c.l.b16 %v345
        %v429 = vunpack.c.l.b16 %v346
        %v430 = vunpack.c.l.b16 %v347
        %v431 = vunpack.c.l.b16 %v348
        %v432 = vunpack.c.l.b16 %v349
        %v433 = vunpack.c.l.b16 %v350
        %v434 = vunpack.c.l.b16 %v355
        %v435 = vunpack.c.l.b16 %v356
        %v436 = vpack.c.b16 %v405, %v404
        %v437 = vpack.c.b16 %v407, %v406
        %v438 = vpack.c.b16 %v409, %v408
        %v439 = vpack.c.b16 %v411, %v410
        %v440 = vpack.c.b16 %v413, %v412
        %v441 = vpack.c.b16 %v415, %v414
        %v442 = vpack.c.b16 %v417, %v416
        %v443 = vpack.c.b16 %v419, %v418
        %v444 = vpack.c.b16 %v421, %v420
        %v445 = vpack.c.b16 %v423, %v422
        %v446 = vpack.c.b16 %v425, %v424
        %v447 = vpack.c.b16 %v427, %v426
        %v448 = vpack.c.b16 %v429, %v428
        %v449 = vpack.c.b16 %v431, %v430
        %v450 = vpack.c.b16 %v433, %v432
        %v451 = vpack.c.b16 %v435, %v434
        %vm452 = vcmask 195584
        %v454 = vsel %vm452, %v370, 0
        %v457 = vsel %vm452, %v371, 0
        %v460 = vsel %vm452, %v436, 0
        %v463 = vsel %vm452, %v437, 0
        %v466 = vsel %vm452, %v438, 0
        %v469 = vsel %vm452, %v439, 0
        %v472 = vsel %vm452, %v440, 0
        %v475 = vsel %vm452, %v441, 0
        %v478 = vsel %vm452, %v442, 0
        %v481 = vsel %vm452, %v443, 0
        %v484 = vsel %vm452, %v444, 0
        %v487 = vsel %vm452, %v445, 0
        %v490 = vsel %vm452, %v446, 0
        %v493 = vsel %vm452, %v447, 0
        %v496 = vsel %vm452, %v448, 0
        %v499 = vsel %vm452, %v449, 0
        %v502 = vsel %vm452, %v450, 0
        %v505 = vsel %vm452, %v451, 0
        %507 = vmatprep.subr.bf16.mxu0 0
        %508 = vmatpush1.bf16.xpose.msra.mxu0 %v460
        %509 = vmatprep.subr.bf16.mxu0 0
        %510 = vmatpush1.bf16.xpose.msra.mxu0 %v463
        %511 = vmatprep.subr.bf16.mxu0 0
        %512 = vmatpush1.bf16.xpose.msra.mxu0 %v466
        %513 = vmatprep.subr.bf16.mxu0 0
        %514 = vmatpush1.bf16.xpose.msra.mxu0 %v469
        %515 = vmatprep.subr.bf16.mxu0 0
        %516 = vmatpush1.bf16.xpose.msra.mxu0 %v472
        %517 = vmatprep.subr.bf16.mxu0 0
        %518 = vmatpush1.bf16.xpose.msra.mxu0 %v475
        %519 = vmatprep.subr.bf16.mxu0 0
        %520 = vmatpush1.bf16.xpose.msra.mxu0 %v478
        %521 = vmatprep.subr.bf16.mxu0 0
        %522 = vmatpush1.bf16.xpose.msra.mxu0 %v481
        %523 = vmatprep.subr.bf16.mxu0 0
        %524 = vmatpush1.bf16.xpose.msra.mxu0 %v484
        %525 = vmatprep.subr.bf16.mxu0 0
        %526 = vmatpush1.bf16.xpose.msra.mxu0 %v487
        %527 = vmatprep.subr.bf16.mxu0 0
        %528 = vmatpush1.bf16.xpose.msra.mxu0 %v490
        %529 = vmatprep.subr.bf16.mxu0 0
        %530 = vmatpush1.bf16.xpose.msra.mxu0 %v493
        %531 = vmatprep.subr.bf16.mxu0 0
        %532 = vmatpush1.bf16.xpose.msra.mxu0 %v496
        %533 = vmatprep.subr.bf16.mxu0 0
        %534 = vmatpush1.bf16.xpose.msra.mxu0 %v499
        %535 = vmatprep.subr.bf16.mxu0 0
        %536 = vmatpush1.bf16.xpose.msra.mxu0 %v502
        %537 = vmatprep.subr.bf16.mxu0 0
        %538 = vmatpush1.bf16.xpose.msra.mxu0 %v505
        %539 = vmatprep.mubr.bf16.mxu0 0
        %540 = vmatmul.mubr.bf16.gmra.mrb[0].mxu0 %v454
        %v541 = vpop.f32.mrb[0].mxu0
        %v542 = vadd.f32 0.0, %v541
        %v543 = vpop.f32.mrb[0].mxu0
        %v544 = vadd.f32 0.0, %v543
        %v545 = vpop.f32.mrb[0].mxu0
        %v546 = vadd.f32 0.0, %v545
        %v547 = vpop.f32.mrb[0].mxu0
        %v548 = vadd.f32 0.0, %v547
        %549 = vmatprep.mubr.bf16.mxu0 0
        %550 = vmatmul.mubr.bf16.gmra.mrb[0].mxu0 %v457
        %v551 = vpop.f32.mrb[0].mxu0
        %v552 = vadd.f32 0.0, %v551
        %v553 = vpop.f32.mrb[0].mxu0
        %v554 = vadd.f32 0.0, %v553
        %v555 = vpop.f32.mrb[0].mxu0
        %v556 = vadd.f32 0.0, %v555
        %v557 = vpop.f32.mrb[0].mxu0
        %v558 = vadd.f32 0.0, %v557
        %559 = vdwg.mxu0
        %v564 = vunpack.c.l.b16 %v351
        %v565 = vunpack.c.l.b16 %v352
        %v566 = vunpack.c.l.b16 %v353
        %v567 = vunpack.c.l.b16 %v354
        %v568 = vpack.c.b16 %v565, %v564
        %v569 = vpack.c.b16 %v567, %v566
        %v572 = vunpack.c.l.b16 %v319
        %v573 = vunpack.c.l.b16 %v320
        %v574 = vpack.c.b16 %v573, %v572
        %v576 = vsel %vm452, %v568, 0
        %v579 = vsel %vm452, %v569, 0
        %v582 = vsel %vm452, %v574, 0
        %584 = vmatprep.subr.bf16.mxu0 0
        %585 = vmatpush1.bf16.xpose.msra.mxu0 %v582
        %586 = vmatprep.subr.bf16.mxu0 0
        %587 = vmatpush1.bf16.xpose.msra.mxu0 %v460
        %588 = vmatprep.subr.bf16.mxu0 0
        %589 = vmatpush1.bf16.xpose.msra.mxu0 %v463
        %590 = vmatprep.subr.bf16.mxu0 0
        %591 = vmatpush1.bf16.xpose.msra.mxu0 %v466
        %592 = vmatprep.subr.bf16.mxu0 0
        %593 = vmatpush1.bf16.xpose.msra.mxu0 %v469
        %594 = vmatprep.subr.bf16.mxu0 0
        %595 = vmatpush1.bf16.xpose.msra.mxu0 %v472
        %596 = vmatprep.subr.bf16.mxu0 0
        %597 = vmatpush1.bf16.xpose.msra.mxu0 %v475
        %598 = vmatprep.subr.bf16.mxu0 0
        %599 = vmatpush1.bf16.xpose.msra.mxu0 %v478
        %600 = vmatprep.subr.bf16.mxu0 0
        %601 = vmatpush1.bf16.xpose.msra.mxu0 %v481
        %602 = vmatprep.subr.bf16.mxu0 0
        %603 = vmatpush1.bf16.xpose.msra.mxu0 %v484
        %604 = vmatprep.subr.bf16.mxu0 0
        %605 = vmatpush1.bf16.xpose.msra.mxu0 %v487
        %606 = vmatprep.subr.bf16.mxu0 0
        %607 = vmatpush1.bf16.xpose.msra.mxu0 %v490
        %608 = vmatprep.subr.bf16.mxu0 0
        %609 = vmatpush1.bf16.xpose.msra.mxu0 %v493
        %610 = vmatprep.subr.bf16.mxu0 0
        %611 = vmatpush1.bf16.xpose.msra.mxu0 %v496
        %612 = vmatprep.subr.bf16.mxu0 0
        %613 = vmatpush1.bf16.xpose.msra.mxu0 %v499
        %614 = vmatprep.subr.bf16.mxu0 0
        %615 = vmatpush1.bf16.xpose.msra.mxu0 %v502
        %616 = vmatprep.mubr.bf16.mxu0 0
        %617 = vmatmul.mubr.bf16.gmra.mrb[0].mxu0 %v576
        %v618 = vpop.f32.mrb[0].mxu0
        %v619 = vadd.f32 %v542, %v618
        %v620 = vpop.f32.mrb[0].mxu0
        %v621 = vadd.f32 %v544, %v620
        %v622 = vpop.f32.mrb[0].mxu0
        %v623 = vadd.f32 %v546, %v622
        %v624 = vpop.f32.mrb[0].mxu0
        %v625 = vadd.f32 %v548, %v624
        %626 = vmatprep.mubr.bf16.mxu0 0
        %627 = vmatmul.mubr.bf16.gmra.mrb[0].mxu0 %v579
        %v628 = vpop.f32.mrb[0].mxu0
        %v629 = vadd.f32 %v552, %v628
        %v630 = vpop.f32.mrb[0].mxu0
        %v631 = vadd.f32 %v554, %v630
        %v632 = vpop.f32.mrb[0].mxu0
        %v633 = vadd.f32 %v556, %v632
        %v634 = vpop.f32.mrb[0].mxu0
        %v635 = vadd.f32 %v558, %v634
        %636 = vdwg.mxu0
        %v637 = vld [vmem:[%s303 + $0x18] sm:$0xf]
        %v638 = vld [vmem:[%s303 + $0x1c] sm:$0xf]
        %v639 = vld [vmem:[%s303 + $0x20] sm:$0xf]
        %v640 = vld [vmem:[%s303 + $0x24] sm:$0xf]
        %v641 = vld [vmem:[%s303 + $0x28] sm:$0xf]
        %v642 = vld [vmem:[%s303 + $0x2c] sm:$0xf]
        %v643 = vld [vmem:[%s303 + $0x30] sm:$0xf]
        %v644 = vld [vmem:[%s303 + $0x34] sm:$0xf]
        %v645 = vld [vmem:[%s303 + $0x38] sm:$0xf]
        %v646 = vld [vmem:[%s303 + $0x3c] sm:$0xf]
        %v647 = vld [vmem:[%s303 + $0x40] sm:$0xf]
        %v648 = vld [vmem:[%s303 + $0x44] sm:$0xf]
        %v649 = vld [vmem:[%s303 + $0x48] sm:$0xf]
        %v650 = vld [vmem:[%s303 + $0x4c] sm:$0xf]
        %v651 = vld [vmem:[%s303 + $0x50] sm:$0xf]
        %v652 = vld [vmem:[%s303 + $0x54] sm:$0xf]
        %v653 = vld [vmem:[%s303 + $0x58] sm:$0xf]
        %v654 = vld [vmem:[%s303 + $0x5c] sm:$0xf]
        %v655 = vld [vmem:[%s303 + $0x60] sm:$0xf]
        %v656 = vld [vmem:[%s303 + $0x64] sm:$0xf]
        %v657 = vld [vmem:[%s303 + $0x68] sm:$0xf]
        %v658 = vld [vmem:[%s303 + $0x6c] sm:$0xf]
        %v659 = vld [vmem:[%s303 + $0x70] sm:$0xf]
        %v660 = vld [vmem:[%s303 + $0x74] sm:$0xf]
        %v661 = vld [vmem:[%s303 + $0x78] sm:$0xf]
        %v662 = vld [vmem:[%s303 + $0x7c] sm:$0xf]
        %v663 = vld [vmem:[%s303 + $0x80] sm:$0xf]
        %v664 = vld [vmem:[%s303 + $0x84] sm:$0xf]
        %v665 = vld [vmem:[%s303 + $0x88] sm:$0xf]
        %v666 = vld [vmem:[%s303 + $0x8c] sm:$0xf]
        %v667 = vld [vmem:[%s303 + $0x90] sm:$0xf]
        %v668 = vld [vmem:[%s303 + $0x94] sm:$0xf]
        %s669 = scalar_lea.vmem %s2, 32
        %v670 = vld [vmem:[%s669] sm:$0xf]
        %v671 = vld [vmem:[%s669 + $0x4] sm:$0xf]
        %v672 = vld [vmem:[%s669 + $0x8] sm:$0xf]
        %v673 = vld [vmem:[%s669 + $0xc] sm:$0xf]
        %v678 = vunpack.c.l.b16 %v670
        %v679 = vunpack.c.l.b16 %v671
        %v680 = vunpack.c.l.b16 %v672
        %v681 = vunpack.c.l.b16 %v673
        %v682 = vpack.c.b16 %v679, %v678
        %v683 = vpack.c.b16 %v681, %v680
        %v716 = vunpack.c.l.b16 %v637
        %v717 = vunpack.c.l.b16 %v638
        %v718 = vunpack.c.l.b16 %v639
        %v719 = vunpack.c.l.b16 %v640
        %v720 = vunpack.c.l.b16 %v641
        %v721 = vunpack.c.l.b16 %v642
        %v722 = vunpack.c.l.b16 %v643
        %v723 = vunpack.c.l.b16 %v644
        %v724 = vunpack.c.l.b16 %v645
        %v725 = vunpack.c.l.b16 %v646
        %v726 = vunpack.c.l.b16 %v647
        %v727 = vunpack.c.l.b16 %v648
        %v728 = vunpack.c.l.b16 %v649
        %v729 = vunpack.c.l.b16 %v650
        %v730 = vunpack.c.l.b16 %v651
        %v731 = vunpack.c.l.b16 %v652
        %v732 = vunpack.c.l.b16 %v653
        %v733 = vunpack.c.l.b16 %v654
        %v734 = vunpack.c.l.b16 %v655
        %v735 = vunpack.c.l.b16 %v656
        %v736 = vunpack.c.l.b16 %v657
        %v737 = vunpack.c.l.b16 %v658
        %v738 = vunpack.c.l.b16 %v659
        %v739 = vunpack.c.l.b16 %v660
        %v740 = vunpack.c.l.b16 %v661
        %v741 = vunpack.c.l.b16 %v662
        %v742 = vunpack.c.l.b16 %v663
        %v743 = vunpack.c.l.b16 %v664
        %v744 = vunpack.c.l.b16 %v665
        %v745 = vunpack.c.l.b16 %v666
        %v746 = vunpack.c.l.b16 %v667
        %v747 = vunpack.c.l.b16 %v668
        %v748 = vpack.c.b16 %v717, %v716
        %v749 = vpack.c.b16 %v719, %v718
        %v750 = vpack.c.b16 %v721, %v720
        %v751 = vpack.c.b16 %v723, %v722
        %v752 = vpack.c.b16 %v725, %v724
        %v753 = vpack.c.b16 %v727, %v726
        %v754 = vpack.c.b16 %v729, %v728
        %v755 = vpack.c.b16 %v731, %v730
        %v756 = vpack.c.b16 %v733, %v732
        %v757 = vpack.c.b16 %v735, %v734
        %v758 = vpack.c.b16 %v737, %v736
        %v759 = vpack.c.b16 %v739, %v738
        %v760 = vpack.c.b16 %v741, %v740
        %v761 = vpack.c.b16 %v743, %v742
        %v762 = vpack.c.b16 %v745, %v744
        %v763 = vpack.c.b16 %v747, %v746
        %v765 = vsel %vm452, %v682, 0
        %v768 = vsel %vm452, %v683, 0
        %v771 = vsel %vm452, %v748, 0
        %v774 = vsel %vm452, %v749, 0
        %v777 = vsel %vm452, %v750, 0
        %v780 = vsel %vm452, %v751, 0
        %v783 = vsel %vm452, %v752, 0
        %v786 = vsel %vm452, %v753, 0
        %v789 = vsel %vm452, %v754, 0
        %v792 = vsel %vm452, %v755, 0
        %v795 = vsel %vm452, %v756, 0
        %v798 = vsel %vm452, %v757, 0
        %v801 = vsel %vm452, %v758, 0
        %v804 = vsel %vm452, %v759, 0
        %v807 = vsel %vm452, %v760, 0
        %v810 = vsel %vm452, %v761, 0
        %v813 = vsel %vm452, %v762, 0
        %v816 = vsel %vm452, %v763, 0
        %818 = vmatprep.subr.bf16.mxu0 0
        %819 = vmatpush1.bf16.xpose.msra.mxu0 %v771
        %820 = vmatprep.subr.bf16.mxu0 0
        %821 = vmatpush1.bf16.xpose.msra.mxu0 %v774
        %822 = vmatprep.subr.bf16.mxu0 0
        %823 = vmatpush1.bf16.xpose.msra.mxu0 %v777
        %824 = vmatprep.subr.bf16.mxu0 0
        %825 = vmatpush1.bf16.xpose.msra.mxu0 %v780
        %826 = vmatprep.subr.bf16.mxu0 0
        %827 = vmatpush1.bf16.xpose.msra.mxu0 %v783
        %828 = vmatprep.subr.bf16.mxu0 0
        %829 = vmatpush1.bf16.xpose.msra.mxu0 %v786
        %830 = vmatprep.subr.bf16.mxu0 0
        %831 = vmatpush1.bf16.xpose.msra.mxu0 %v789
        %832 = vmatprep.subr.bf16.mxu0 0
        %833 = vmatpush1.bf16.xpose.msra.mxu0 %v792
        %834 = vmatprep.subr.bf16.mxu0 0
        %835 = vmatpush1.bf16.xpose.msra.mxu0 %v795
        %836 = vmatprep.subr.bf16.mxu0 0
        %837 = vmatpush1.bf16.xpose.msra.mxu0 %v798
        %838 = vmatprep.subr.bf16.mxu0 0
        %839 = vmatpush1.bf16.xpose.msra.mxu0 %v801
        %840 = vmatprep.subr.bf16.mxu0 0
        %841 = vmatpush1.bf16.xpose.msra.mxu0 %v804
        %842 = vmatprep.subr.bf16.mxu0 0
        %843 = vmatpush1.bf16.xpose.msra.mxu0 %v807
        %844 = vmatprep.subr.bf16.mxu0 0
        %845 = vmatpush1.bf16.xpose.msra.mxu0 %v810
        %846 = vmatprep.subr.bf16.mxu0 0
        %847 = vmatpush1.bf16.xpose.msra.mxu0 %v813
        %848 = vmatprep.subr.bf16.mxu0 0
        %849 = vmatpush1.bf16.xpose.msra.mxu0 %v816
        %850 = vmatprep.mubr.bf16.mxu0 0
        %851 = vmatmul.mubr.bf16.gmra.mrb[0].mxu0 %v765
        %v852 = vpop.f32.mrb[0].mxu0
        %v853 = vadd.f32 0.0, %v852
        %v854 = vpop.f32.mrb[0].mxu0
        %v855 = vadd.f32 0.0, %v854
        %v856 = vpop.f32.mrb[0].mxu0
        %v857 = vadd.f32 0.0, %v856
        %v858 = vpop.f32.mrb[0].mxu0
        %v859 = vadd.f32 0.0, %v858
        %860 = vmatprep.mubr.bf16.mxu0 0
        %861 = vmatmul.mubr.bf16.gmra.mrb[0].mxu0 %v768
        %v862 = vpop.f32.mrb[0].mxu0
        %v863 = vadd.f32 0.0, %v862
        %v864 = vpop.f32.mrb[0].mxu0
        %v865 = vadd.f32 0.0, %v864
        %v866 = vpop.f32.mrb[0].mxu0
        %v867 = vadd.f32 0.0, %v866
        %v868 = vpop.f32.mrb[0].mxu0
        %v869 = vadd.f32 0.0, %v868
        %870 = vdwg.mxu0
        %v871 = vadd.f32 %v619, %v853
        %v872 = vadd.f32 %v621, %v855
        %v873 = vadd.f32 %v623, %v857
        %v874 = vadd.f32 %v625, %v859
        %v875 = vadd.f32 %v629, %v863
        %v876 = vadd.f32 %v631, %v865
        %v877 = vadd.f32 %v633, %v867
        %v878 = vadd.f32 %v635, %v869
        %v879 = vadd.f32 %v871, %v872
        %880 = vadd.xlane.f32.xlu0 %v879
        %v881 = vpop.xlane.xlu0 %880
        %v882 = vadd.f32 %v873, %v874
        %883 = vadd.xlane.f32.xlu0 %v882
        %v884 = vpop.xlane.xlu0 %883
        %v885 = vadd.f32 %v875, %v876
        %886 = vadd.xlane.f32.xlu0 %v885
        %v887 = vpop.xlane.xlu0 %886
        %v888 = vadd.f32 %v877, %v878
        %889 = vadd.xlane.f32.xlu0 %v888
        %v890 = vpop.xlane.xlu0 %889
        %v891 = vrcp.pop 256.0
        %v892 = vmul.f32 %v881, %v891
        %v893 = vmul.f32 %v884, %v891
        %v894 = vmul.f32 %v887, %v891
        %v895 = vmul.f32 %v890, %v891
        %v896 = vmul.f32 %v871, %v871
        %v897 = vmul.f32 %v872, %v872
        %v898 = vmul.f32 %v873, %v873
        %v899 = vmul.f32 %v874, %v874
        %v900 = vmul.f32 %v875, %v875
        %v901 = vmul.f32 %v876, %v876
        %v902 = vmul.f32 %v877, %v877
        %v903 = vmul.f32 %v878, %v878
        %v904 = vadd.f32 %v896, %v897
        %905 = vadd.xlane.f32.xlu0 %v904
        %v906 = vpop.xlane.xlu0 %905
        %v907 = vadd.f32 %v898, %v899
        %908 = vadd.xlane.f32.xlu0 %v907
        %v909 = vpop.xlane.xlu0 %908
        %v910 = vadd.f32 %v900, %v901
        %911 = vadd.xlane.f32.xlu0 %v910
        %v912 = vpop.xlane.xlu0 %911
        %v913 = vadd.f32 %v902, %v903
        %914 = vadd.xlane.f32.xlu0 %v913
        %v915 = vpop.xlane.xlu0 %914
        %v916 = vmul.f32 %v906, %v891
        %v917 = vmul.f32 %v909, %v891
        %v918 = vmul.f32 %v912, %v891
        %v919 = vmul.f32 %v915, %v891
        %v920 = vmul.f32 %v892, %v892
        %v921 = vmul.f32 %v893, %v893
        %v922 = vmul.f32 %v894, %v894
        %v923 = vmul.f32 %v895, %v895
        %v924 = vsub.f32 %v916, %v920
        %v925 = vsub.f32 %v917, %v921
        %v926 = vsub.f32 %v918, %v922
        %v927 = vsub.f32 %v919, %v923
        %v928 = vsub.f32 %v871, %v892
        %v929 = vsub.f32 %v872, %v892
        %v930 = vsub.f32 %v873, %v893
        %v931 = vsub.f32 %v874, %v893
        %v932 = vsub.f32 %v875, %v894
        %v933 = vsub.f32 %v876, %v894
        %v934 = vsub.f32 %v877, %v895
        %v935 = vsub.f32 %v878, %v895
        %v936 = vadd.f32 %v924, 1e-05
        %v937 = vadd.f32 %v925, 1e-05
        %v938 = vadd.f32 %v926, 1e-05
        %v939 = vadd.f32 %v927, 1e-05
        %v940 = vrsqrt.pop %v936
        %v941 = vrsqrt.pop %v937
        %v942 = vrsqrt.pop %v938
        %v943 = vrsqrt.pop %v939
        %v944 = vmul.f32 %v928, %v940
        %v945 = vmul.f32 %v929, %v940
        %v946 = vmul.f32 %v930, %v941
        %v947 = vmul.f32 %v931, %v941
        %v948 = vmul.f32 %v932, %v942
        %v949 = vmul.f32 %v933, %v942
        %v950 = vmul.f32 %v934, %v943
        %v951 = vmul.f32 %v935, %v943
        %v952 = vmul.f32 %v944, 0.01
        %v953 = vmul.f32 %v945, 0.01
        %v954 = vmul.f32 %v946, 0.01
        %v955 = vmul.f32 %v947, 0.01
        %v956 = vmul.f32 %v948, 0.01
        %v957 = vmul.f32 %v949, 0.01
        %v958 = vmul.f32 %v950, 0.01
        %v959 = vmul.f32 %v951, 0.01
        %v960 = vmax.f32 %v944, %v952
        %v961 = vmax.f32 %v945, %v953
        %v962 = vmax.f32 %v946, %v954
        %v963 = vmax.f32 %v947, %v955
        %v964 = vmax.f32 %v948, %v956
        %v965 = vmax.f32 %v949, %v957
        %v966 = vmax.f32 %v950, %v958
        %v967 = vmax.f32 %v951, %v959
        %968 = vxpose.xlu0.b32.start [1/16] %v960, 128
        %969 = vxpose.xlu0.b32.cont [2/16] %v962, 128
        %970 = vxpose.xlu0.b32.cont [3/16] %v964, 128
        %971 = vxpose.xlu0.b32.cont [4/16] %v966, 128
        %972 = vxpose.xlu0.b32.cont [5/16] 0.0, 128
        %973 = vxpose.xlu0.b32.cont [6/16] 0.0, 128
        %974 = vxpose.xlu0.b32.cont [7/16] 0.0, 128
        %975 = vxpose.xlu0.b32.cont [8/16] 0.0, 128
        %976 = vxpose.xlu0.b32.cont [9/16] 0.0, 128
        %977 = vxpose.xlu0.b32.cont [10/16] 0.0, 128
        %978 = vxpose.xlu0.b32.cont [11/16] 0.0, 128
        %979 = vxpose.xlu0.b32.cont [12/16] 0.0, 128
        %980 = vxpose.xlu0.b32.cont [13/16] 0.0, 128
        %981 = vxpose.xlu0.b32.cont [14/16] 0.0, 128
        %982 = vxpose.xlu0.b32.cont [15/16] 0.0, 128
        %983 = vxpose.xlu0.b32.end [16/16] 0.0, 128
        %v984 = vpop.trf.xlu0
        %v985 = vpop.trf.xlu0
        %v986 = vpop.trf.xlu0
        %v987 = vpop.trf.xlu0
        %v988 = vpop.trf.xlu0
        %v989 = vpop.trf.xlu0
        %v990 = vpop.trf.xlu0
        %v991 = vpop.trf.xlu0
        %v992 = vpop.trf.xlu0
        %v993 = vpop.trf.xlu0
        %v994 = vpop.trf.xlu0
        %v995 = vpop.trf.xlu0
        %v996 = vpop.trf.xlu0
        %v997 = vpop.trf.xlu0
        %v998 = vpop.trf.xlu0
        %v999 = vpop.trf.xlu0
        %1000 = vxpose.xlu0.b32.start [1/16] %v961, 128
        %1001 = vxpose.xlu0.b32.cont [2/16] %v963, 128
        %1002 = vxpose.xlu0.b32.cont [3/16] %v965, 128
        %1003 = vxpose.xlu0.b32.cont [4/16] %v967, 128
        %1004 = vxpose.xlu0.b32.cont [5/16] 0.0, 128
        %1005 = vxpose.xlu0.b32.cont [6/16] 0.0, 128
        %1006 = vxpose.xlu0.b32.cont [7/16] 0.0, 128
        %1007 = vxpose.xlu0.b32.cont [8/16] 0.0, 128
        %1008 = vxpose.xlu0.b32.cont [9/16] 0.0, 128
        %1009 = vxpose.xlu0.b32.cont [10/16] 0.0, 128
        %1010 = vxpose.xlu0.b32.cont [11/16] 0.0, 128
        %1011 = vxpose.xlu0.b32.cont [12/16] 0.0, 128
        %1012 = vxpose.xlu0.b32.cont [13/16] 0.0, 128
        %1013 = vxpose.xlu0.b32.cont [14/16] 0.0, 128
        %1014 = vxpose.xlu0.b32.cont [15/16] 0.0, 128
        %1015 = vxpose.xlu0.b32.end [16/16] 0.0, 128
        %v1016 = vpop.trf.xlu0
        %v1017 = vpop.trf.xlu0
        %v1018 = vpop.trf.xlu0
        %v1019 = vpop.trf.xlu0
        %v1020 = vpop.trf.xlu0
        %v1021 = vpop.trf.xlu0
        %v1022 = vpop.trf.xlu0
        %v1023 = vpop.trf.xlu0
        %v1024 = vpop.trf.xlu0
        %v1025 = vpop.trf.xlu0
        %v1026 = vpop.trf.xlu0
        %v1027 = vpop.trf.xlu0
        %v1028 = vpop.trf.xlu0
        %v1029 = vpop.trf.xlu0
        %v1030 = vpop.trf.xlu0
        %v1031 = vpop.trf.xlu0
        %1032 = vst.msk [vmem:[#allocation2 + $0x20] sm:$0xff] %vm305, %v984
        %1033 = vst.msk [vmem:[#allocation2 + $0x28] sm:$0xff] %vm305, %v985
        %1034 = vst.msk [vmem:[#allocation2 + $0x30] sm:$0xff] %vm305, %v986
        %1035 = vst.msk [vmem:[#allocation2 + $0x38] sm:$0xff] %vm305, %v987
        %1036 = vst.msk [vmem:[#allocation2 + $0x40] sm:$0xff] %vm305, %v988
        %1037 = vst.msk [vmem:[#allocation2 + $0x48] sm:$0xff] %vm305, %v989
        %1038 = vst.msk [vmem:[#allocation2 + $0x50] sm:$0xff] %vm305, %v990
        %1039 = vst.msk [vmem:[#allocation2 + $0x58] sm:$0xff] %vm305, %v991
        %1040 = vst.msk [vmem:[#allocation2 + $0x60] sm:$0xff] %vm305, %v992
        %1041 = vst.msk [vmem:[#allocation2 + $0x68] sm:$0xff] %vm305, %v993
        %1042 = vst.msk [vmem:[#allocation2 + $0x70] sm:$0xff] %vm305, %v994
        %1043 = vst.msk [vmem:[#allocation2 + $0x78] sm:$0xff] %vm305, %v995
        %1044 = vst.msk [vmem:[#allocation2 + $0x80] sm:$0xff] %vm305, %v996
        %1045 = vst.msk [vmem:[#allocation2 + $0x88] sm:$0xff] %vm305, %v997
        %1046 = vst.msk [vmem:[#allocation2 + $0x90] sm:$0xff] %vm305, %v998
        %1047 = vst.msk [vmem:[#allocation2 + $0x98] sm:$0xff] %vm305, %v999
        %1048 = vst.msk [vmem:[#allocation2 + $0xa0] sm:$0xff] %vm305, %v1016
        %1049 = vst.msk [vmem:[#allocation2 + $0xa8] sm:$0xff] %vm305, %v1017
        %1050 = vst.msk [vmem:[#allocation2 + $0xb0] sm:$0xff] %vm305, %v1018
        %1051 = vst.msk [vmem:[#allocation2 + $0xb8] sm:$0xff] %vm305, %v1019
        %1052 = vst.msk [vmem:[#allocation2 + $0xc0] sm:$0xff] %vm305, %v1020
        %1053 = vst.msk [vmem:[#allocation2 + $0xc8] sm:$0xff] %vm305, %v1021
        %1054 = vst.msk [vmem:[#allocation2 + $0xd0] sm:$0xff] %vm305, %v1022
        %1055 = vst.msk [vmem:[#allocation2 + $0xd8] sm:$0xff] %vm305, %v1023
        %1056 = vst.msk [vmem:[#allocation2 + $0xe0] sm:$0xff] %vm305, %v1024
        %1057 = vst.msk [vmem:[#allocation2 + $0xe8] sm:$0xff] %vm305, %v1025
        %1058 = vst.msk [vmem:[#allocation2 + $0xf0] sm:$0xff] %vm305, %v1026
        %1059 = vst.msk [vmem:[#allocation2 + $0xf8] sm:$0xff] %vm305, %v1027
        %1060 = vst.msk [vmem:[#allocation2 + $0x100] sm:$0xff] %vm305, %v1028
        %1061 = vst.msk [vmem:[#allocation2 + $0x108] sm:$0xff] %vm305, %v1029
        %1062 = vst.msk [vmem:[#allocation2 + $0x110] sm:$0xff] %vm305, %v1030
        %1063 = vst.msk [vmem:[#allocation2 + $0x118] sm:$0xff] %vm305, %v1031
        %v1064 = vld [vmem:[#allocation2 + $0xf] sm:$0xff]
        %v1065 = vld [vmem:[#allocation2 + $0x17] sm:$0xff]
        %v1066 = vld [vmem:[#allocation2 + $0x1f] sm:$0xff]
        %v1067 = vld [vmem:[#allocation2 + $0x27] sm:$0xff]
        %v1068 = vld [vmem:[#allocation2 + $0x2f] sm:$0xff]
        %v1069 = vld [vmem:[#allocation2 + $0x37] sm:$0xff]
        %v1070 = vld [vmem:[#allocation2 + $0x3f] sm:$0xff]
        %v1071 = vld [vmem:[#allocation2 + $0x47] sm:$0xff]
        %v1072 = vld [vmem:[#allocation2 + $0x4f] sm:$0xff]
        %v1073 = vld [vmem:[#allocation2 + $0x57] sm:$0xff]
        %v1074 = vld [vmem:[#allocation2 + $0x5f] sm:$0xff]
        %v1075 = vld [vmem:[#allocation2 + $0x67] sm:$0xff]
        %v1076 = vld [vmem:[#allocation2 + $0x6f] sm:$0xff]
        %v1077 = vld [vmem:[#allocation2 + $0x77] sm:$0xff]
        %v1078 = vld [vmem:[#allocation2 + $0x7f] sm:$0xff]
        %v1079 = vld [vmem:[#allocation2 + $0x87] sm:$0xff]
        %v1080 = vld [vmem:[#allocation2 + $0x8f] sm:$0xff]
        %v1081 = vld [vmem:[#allocation2 + $0x97] sm:$0xff]
        %v1082 = vld [vmem:[#allocation2 + $0x9f] sm:$0xff]
        %v1083 = vld [vmem:[#allocation2 + $0xa7] sm:$0xff]
        %v1084 = vld [vmem:[#allocation2 + $0xaf] sm:$0xff]
        %v1085 = vld [vmem:[#allocation2 + $0xb7] sm:$0xff]
        %v1086 = vld [vmem:[#allocation2 + $0xbf] sm:$0xff]
        %v1087 = vld [vmem:[#allocation2 + $0xc7] sm:$0xff]
        %v1088 = vld [vmem:[#allocation2 + $0xcf] sm:$0xff]
        %v1089 = vld [vmem:[#allocation2 + $0xd7] sm:$0xff]
        %v1090 = vld [vmem:[#allocation2 + $0xdf] sm:$0xff]
        %v1091 = vld [vmem:[#allocation2 + $0xe7] sm:$0xff]
        %v1092 = vld [vmem:[#allocation2 + $0xef] sm:$0xff]
        %v1093 = vld [vmem:[#allocation2 + $0xf7] sm:$0xff]
        %v1094 = vld [vmem:[#allocation2 + $0xff] sm:$0xff]
        %v1095 = vld [vmem:[#allocation2 + $0x107] sm:$0xff]
        %v1096 = vld [vmem:[#allocation2 + $0x10f] sm:$0xff]
        %v1097 = vld [vmem:[#allocation2 + $0x117] sm:$0xff]
        %v1098 = vld [vmem:[#allocation2 + $0x11f] sm:$0xff]
        %v1099 = vld [vmem:[#allocation2 + $0x127] sm:$0xff]
        %v1100 = vld [vmem:[%s3] sm:$0xff]
        %v1101 = vld [vmem:[%s3 + $0x8] sm:$0xff]
        %s1102 = scalar_lea.vmem %s3, 48
        %v1103 = vld [vmem:[%s1102] sm:$0xff]
        %v1104 = vld [vmem:[%s1102 + $0x8] sm:$0xff]
        %v1106 = vsel %vm305, %v1103, 0
        %v1109 = vsel %vm305, %v1104, 0
        %v1112 = vsel %vm305, %v1066, 0
        %v1115 = vsel %vm305, %v1067, 0
        %v1118 = vsel %vm305, %v1068, 0
        %v1121 = vsel %vm305, %v1069, 0
        %v1124 = vsel %vm305, %v1070, 0
        %v1127 = vsel %vm305, %v1071, 0
        %v1130 = vsel %vm305, %v1072, 0
        %v1133 = vsel %vm305, %v1073, 0
        %v1136 = vsel %vm305, %v1074, 0
        %v1139 = vsel %vm305, %v1075, 0
        %v1142 = vsel %vm305, %v1076, 0
        %v1145 = vsel %vm305, %v1077, 0
        %v1148 = vsel %vm305, %v1078, 0
        %v1151 = vsel %vm305, %v1079, 0
        %v1154 = vsel %vm305, %v1080, 0
        %v1157 = vsel %vm305, %v1081, 0
        %v1160 = vsel %vm305, %v1082, 0
        %v1163 = vsel %vm305, %v1083, 0
        %v1166 = vsel %vm305, %v1084, 0
        %v1169 = vsel %vm305, %v1085, 0
        %v1172 = vsel %vm305, %v1086, 0
        %v1175 = vsel %vm305, %v1087, 0
        %v1178 = vsel %vm305, %v1088, 0
        %v1181 = vsel %vm305, %v1089, 0
        %v1184 = vsel %vm305, %v1090, 0
        %v1187 = vsel %vm305, %v1091, 0
        %v1190 = vsel %vm305, %v1092, 0
        %v1193 = vsel %vm305, %v1093, 0
        %v1196 = vsel %vm305, %v1094, 0
        %v1199 = vsel %vm305, %v1095, 0
        %v1202 = vsel %vm305, %v1096, 0
        %v1205 = vsel %vm305, %v1097, 0
        %1207 = vmatprep.subr.mxu0 0.0
        %1208 = vmatpush1.xpose.msra.mxu0 %v1112
        %1209 = vmatprep.subr.mxu0 0.0
        %1210 = vmatpush1.xpose.msra.mxu0 %v1115
        %1211 = vmatprep.subr.mxu0 0.0
        %1212 = vmatpush1.xpose.msra.mxu0 %v1118
        %1213 = vmatprep.subr.mxu0 0.0
        %1214 = vmatpush1.xpose.msra.mxu0 %v1121
        %1215 = vmatprep.subr.mxu0 0.0
        %1216 = vmatpush1.xpose.msra.mxu0 %v1124
        %1217 = vmatprep.subr.mxu0 0.0
        %1218 = vmatpush1.xpose.msra.mxu0 %v1127
        %1219 = vmatprep.subr.mxu0 0.0
        %1220 = vmatpush1.xpose.msra.mxu0 %v1130
        %1221 = vmatprep.subr.mxu0 0.0
        %1222 = vmatpush1.xpose.msra.mxu0 %v1133
        %1223 = vmatprep.subr.mxu0 0.0
        %1224 = vmatpush1.xpose.msra.mxu0 %v1136
        %1225 = vmatprep.subr.mxu0 0.0
        %1226 = vmatpush1.xpose.msra.mxu0 %v1139
        %1227 = vmatprep.subr.mxu0 0.0
        %1228 = vmatpush1.xpose.msra.mxu0 %v1142
        %1229 = vmatprep.subr.mxu0 0.0
        %1230 = vmatpush1.xpose.msra.mxu0 %v1145
        %1231 = vmatprep.subr.mxu0 0.0
        %1232 = vmatpush1.xpose.msra.mxu0 %v1148
        %1233 = vmatprep.subr.mxu0 0.0
        %1234 = vmatpush1.xpose.msra.mxu0 %v1151
        %1235 = vmatprep.subr.mxu0 0.0
        %1236 = vmatpush1.xpose.msra.mxu0 %v1154
        %1237 = vmatprep.subr.mxu0 0.0
        %1238 = vmatpush1.xpose.msra.mxu0 %v1157
        %1239 = vmatprep.subr.mxu0 0.0
        %1240 = vmatpush1.xpose.msra.mxu0 %v1160
        %1241 = vmatprep.subr.mxu0 0.0
        %1242 = vmatpush1.xpose.msra.mxu0 %v1163
        %1243 = vmatprep.subr.mxu0 0.0
        %1244 = vmatpush1.xpose.msra.mxu0 %v1166
        %1245 = vmatprep.subr.mxu0 0.0
        %1246 = vmatpush1.xpose.msra.mxu0 %v1169
        %1247 = vmatprep.subr.mxu0 0.0
        %1248 = vmatpush1.xpose.msra.mxu0 %v1172
        %1249 = vmatprep.subr.mxu0 0.0
        %1250 = vmatpush1.xpose.msra.mxu0 %v1175
        %1251 = vmatprep.subr.mxu0 0.0
        %1252 = vmatpush1.xpose.msra.mxu0 %v1178
        %1253 = vmatprep.subr.mxu0 0.0
        %1254 = vmatpush1.xpose.msra.mxu0 %v1181
        %1255 = vmatprep.subr.mxu0 0.0
        %1256 = vmatpush1.xpose.msra.mxu0 %v1184
        %1257 = vmatprep.subr.mxu0 0.0
        %1258 = vmatpush1.xpose.msra.mxu0 %v1187
        %1259 = vmatprep.subr.mxu0 0.0
        %1260 = vmatpush1.xpose.msra.mxu0 %v1190
        %1261 = vmatprep.subr.mxu0 0.0
        %1262 = vmatpush1.xpose.msra.mxu0 %v1193
        %1263 = vmatprep.subr.mxu0 0.0
        %1264 = vmatpush1.xpose.msra.mxu0 %v1196
        %1265 = vmatprep.subr.mxu0 0.0
        %1266 = vmatpush1.xpose.msra.mxu0 %v1199
        %1267 = vmatprep.subr.mxu0 0.0
        %1268 = vmatpush1.xpose.msra.mxu0 %v1202
        %1269 = vmatprep.subr.mxu0 0.0
        %1270 = vmatpush1.xpose.msra.mxu0 %v1205
        %1271 = vmatprep.mubr.f32.mxu0 0.0
        %1272 = vmatmul.mubr.f32.gmra.mrb[0].mxu0 %v1106
        %v1273 = vpop.f32.mrb[0].mxu0
        %v1274 = vadd.f32 0.0, %v1273
        %v1275 = vpop.f32.mrb[0].mxu0
        %v1276 = vadd.f32 0.0, %v1275
        %1277 = vmatprep.mubr.f32.mxu0 0.0
        %1278 = vmatmul.mubr.f32.gmra.mrb[0].mxu0 %v1109
        %v1279 = vpop.f32.mrb[0].mxu0
        %v1280 = vadd.f32 0.0, %v1279
        %v1281 = vpop.f32.mrb[0].mxu0
        %v1282 = vadd.f32 0.0, %v1281
        %1283 = vdwg.mxu0
        %v1285 = vsel %vm305, %v1100, 0
        %v1288 = vsel %vm305, %v1101, 0
        %v1291 = vsel %vm305, %v1064, 0
        %v1294 = vsel %vm305, %v1065, 0
        %1296 = vmatprep.subr.mxu0 0.0
        %1297 = vmatpush1.xpose.msra.mxu0 %v1291
        %1298 = vmatprep.subr.mxu0 0.0
        %1299 = vmatpush1.xpose.msra.mxu0 %v1294
        %1300 = vmatprep.subr.mxu0 0.0
        %1301 = vmatpush1.xpose.msra.mxu0 %v1112
        %1302 = vmatprep.subr.mxu0 0.0
        %1303 = vmatpush1.xpose.msra.mxu0 %v1115
        %1304 = vmatprep.subr.mxu0 0.0
        %1305 = vmatpush1.xpose.msra.mxu0 %v1118
        %1306 = vmatprep.subr.mxu0 0.0
        %1307 = vmatpush1.xpose.msra.mxu0 %v1121
        %1308 = vmatprep.subr.mxu0 0.0
        %1309 = vmatpush1.xpose.msra.mxu0 %v1124
        %1310 = vmatprep.subr.mxu0 0.0
        %1311 = vmatpush1.xpose.msra.mxu0 %v1127
        %1312 = vmatprep.subr.mxu0 0.0
        %1313 = vmatpush1.xpose.msra.mxu0 %v1130
        %1314 = vmatprep.subr.mxu0 0.0
        %1315 = vmatpush1.xpose.msra.mxu0 %v1133
        %1316 = vmatprep.subr.mxu0 0.0
        %1317 = vmatpush1.xpose.msra.mxu0 %v1136
        %1318 = vmatprep.subr.mxu0 0.0
        %1319 = vmatpush1.xpose.msra.mxu0 %v1139
        %1320 = vmatprep.subr.mxu0 0.0
        %1321 = vmatpush1.xpose.msra.mxu0 %v1142
        %1322 = vmatprep.subr.mxu0 0.0
        %1323 = vmatpush1.xpose.msra.mxu0 %v1145
        %1324 = vmatprep.subr.mxu0 0.0
        %1325 = vmatpush1.xpose.msra.mxu0 %v1148
        %1326 = vmatprep.subr.mxu0 0.0
        %1327 = vmatpush1.xpose.msra.mxu0 %v1151
        %1328 = vmatprep.subr.mxu0 0.0
        %1329 = vmatpush1.xpose.msra.mxu0 %v1154
        %1330 = vmatprep.subr.mxu0 0.0
        %1331 = vmatpush1.xpose.msra.mxu0 %v1157
        %1332 = vmatprep.subr.mxu0 0.0
        %1333 = vmatpush1.xpose.msra.mxu0 %v1160
        %1334 = vmatprep.subr.mxu0 0.0
        %1335 = vmatpush1.xpose.msra.mxu0 %v1163
        %1336 = vmatprep.subr.mxu0 0.0
        %1337 = vmatpush1.xpose.msra.mxu0 %v1166
        %1338 = vmatprep.subr.mxu0 0.0
        %1339 = vmatpush1.xpose.msra.mxu0 %v1169
        %1340 = vmatprep.subr.mxu0 0.0
        %1341 = vmatpush1.xpose.msra.mxu0 %v1172
        %1342 = vmatprep.subr.mxu0 0.0
        %1343 = vmatpush1.xpose.msra.mxu0 %v1175
        %1344 = vmatprep.subr.mxu0 0.0
        %1345 = vmatpush1.xpose.msra.mxu0 %v1178
        %1346 = vmatprep.subr.mxu0 0.0
        %1347 = vmatpush1.xpose.msra.mxu0 %v1181
        %1348 = vmatprep.subr.mxu0 0.0
        %1349 = vmatpush1.xpose.msra.mxu0 %v1184
        %1350 = vmatprep.subr.mxu0 0.0
        %1351 = vmatpush1.xpose.msra.mxu0 %v1187
        %1352 = vmatprep.subr.mxu0 0.0
        %1353 = vmatpush1.xpose.msra.mxu0 %v1190
        %1354 = vmatprep.subr.mxu0 0.0
        %1355 = vmatpush1.xpose.msra.mxu0 %v1193
        %1356 = vmatprep.subr.mxu0 0.0
        %1357 = vmatpush1.xpose.msra.mxu0 %v1196
        %1358 = vmatprep.subr.mxu0 0.0
        %1359 = vmatpush1.xpose.msra.mxu0 %v1199
        %1360 = vmatprep.mubr.f32.mxu0 0.0
        %1361 = vmatmul.mubr.f32.gmra.mrb[0].mxu0 %v1285
        %v1362 = vpop.f32.mrb[0].mxu0
        %v1363 = vadd.f32 %v1274, %v1362
        %v1364 = vpop.f32.mrb[0].mxu0
        %v1365 = vadd.f32 %v1276, %v1364
        %1366 = vmatprep.mubr.f32.mxu0 0.0
        %1367 = vmatmul.mubr.f32.gmra.mrb[0].mxu0 %v1288
        %v1368 = vpop.f32.mrb[0].mxu0
        %v1369 = vadd.f32 %v1280, %v1368
        %v1370 = vpop.f32.mrb[0].mxu0
        %v1371 = vadd.f32 %v1282, %v1370
        %1372 = vdwg.mxu0
        %s1373 = scalar_lea.vmem %s3, 96
        %v1374 = vld [vmem:[%s1373] sm:$0xff]
        %v1375 = vld [vmem:[%s1373 + $0x8] sm:$0xff]
        %v1377 = vsel %vm305, %v1374, 0
        %v1380 = vsel %vm305, %v1375, 0
        %v1383 = vsel %vm305, %v1098, 0
        %v1386 = vsel %vm305, %v1099, 0
        %1388 = vmatprep.subr.mxu0 0.0
        %1389 = vmatpush1.xpose.msra.mxu0 %v1118
        %1390 = vmatprep.subr.mxu0 0.0
        %1391 = vmatpush1.xpose.msra.mxu0 %v1121
        %1392 = vmatprep.subr.mxu0 0.0
        %1393 = vmatpush1.xpose.msra.mxu0 %v1124
        %1394 = vmatprep.subr.mxu0 0.0
        %1395 = vmatpush1.xpose.msra.mxu0 %v1127
        %1396 = vmatprep.subr.mxu0 0.0
        %1397 = vmatpush1.xpose.msra.mxu0 %v1130
        %1398 = vmatprep.subr.mxu0 0.0
        %1399 = vmatpush1.xpose.msra.mxu0 %v1133
        %1400 = vmatprep.subr.mxu0 0.0
        %1401 = vmatpush1.xpose.msra.mxu0 %v1136
        %1402 = vmatprep.subr.mxu0 0.0
        %1403 = vmatpush1.xpose.msra.mxu0 %v1139
        %1404 = vmatprep.subr.mxu0 0.0
        %1405 = vmatpush1.xpose.msra.mxu0 %v1142
        %1406 = vmatprep.subr.mxu0 0.0
        %1407 = vmatpush1.xpose.msra.mxu0 %v1145
        %1408 = vmatprep.subr.mxu0 0.0
        %1409 = vmatpush1.xpose.msra.mxu0 %v1148
        %1410 = vmatprep.subr.mxu0 0.0
        %1411 = vmatpush1.xpose.msra.mxu0 %v1151
        %1412 = vmatprep.subr.mxu0 0.0
        %1413 = vmatpush1.xpose.msra.mxu0 %v1154
        %1414 = vmatprep.subr.mxu0 0.0
        %1415 = vmatpush1.xpose.msra.mxu0 %v1157
        %1416 = vmatprep.subr.mxu0 0.0
        %1417 = vmatpush1.xpose.msra.mxu0 %v1160
        %1418 = vmatprep.subr.mxu0 0.0
        %1419 = vmatpush1.xpose.msra.mxu0 %v1163
        %1420 = vmatprep.subr.mxu0 0.0
        %1421 = vmatpush1.xpose.msra.mxu0 %v1166
        %1422 = vmatprep.subr.mxu0 0.0
        %1423 = vmatpush1.xpose.msra.mxu0 %v1169
        %1424 = vmatprep.subr.mxu0 0.0
        %1425 = vmatpush1.xpose.msra.mxu0 %v1172
        %1426 = vmatprep.subr.mxu0 0.0
        %1427 = vmatpush1.xpose.msra.mxu0 %v1175
        %1428 = vmatprep.subr.mxu0 0.0
        %1429 = vmatpush1.xpose.msra.mxu0 %v1178
        %1430 = vmatprep.subr.mxu0 0.0
        %1431 = vmatpush1.xpose.msra.mxu0 %v1181
        %1432 = vmatprep.subr.mxu0 0.0
        %1433 = vmatpush1.xpose.msra.mxu0 %v1184
        %1434 = vmatprep.subr.mxu0 0.0
        %1435 = vmatpush1.xpose.msra.mxu0 %v1187
        %1436 = vmatprep.subr.mxu0 0.0
        %1437 = vmatpush1.xpose.msra.mxu0 %v1190
        %1438 = vmatprep.subr.mxu0 0.0
        %1439 = vmatpush1.xpose.msra.mxu0 %v1193
        %1440 = vmatprep.subr.mxu0 0.0
        %1441 = vmatpush1.xpose.msra.mxu0 %v1196
        %1442 = vmatprep.subr.mxu0 0.0
        %1443 = vmatpush1.xpose.msra.mxu0 %v1199
        %1444 = vmatprep.subr.mxu0 0.0
        %1445 = vmatpush1.xpose.msra.mxu0 %v1202
        %1446 = vmatprep.subr.mxu0 0.0
        %1447 = vmatpush1.xpose.msra.mxu0 %v1205
        %1448 = vmatprep.subr.mxu0 0.0
        %1449 = vmatpush1.xpose.msra.mxu0 %v1383
        %1450 = vmatprep.subr.mxu0 0.0
        %1451 = vmatpush1.xpose.msra.mxu0 %v1386
        %1452 = vmatprep.mubr.f32.mxu0 0.0
        %1453 = vmatmul.mubr.f32.gmra.mrb[0].mxu0 %v1377
        %v1454 = vpop.f32.mrb[0].mxu0
        %v1455 = vadd.f32 0.0, %v1454
        %v1456 = vpop.f32.mrb[0].mxu0
        %v1457 = vadd.f32 0.0, %v1456
        %1458 = vmatprep.mubr.f32.mxu0 0.0
        %1459 = vmatmul.mubr.f32.gmra.mrb[0].mxu0 %v1380
        %v1460 = vpop.f32.mrb[0].mxu0
        %v1461 = vadd.f32 0.0, %v1460
        %v1462 = vpop.f32.mrb[0].mxu0
        %v1463 = vadd.f32 0.0, %v1462
        %1464 = vdwg.mxu0
        %v1465 = vadd.f32 %v1363, %v1455
        %v1466 = vadd.f32 %v1365, %v1457
        %v1467 = vadd.f32 %v1369, %v1461
        %v1468 = vadd.f32 %v1371, %v1463
        %v1470 = vlaneseq
        %v1471 = vshrl.u32 %v1470, 7
        %v1472 = vsub.s32 0, %v1471
        %v1473 = vrot.slane %v314, %v1472
        %v1474 = vlaneseq
        %v1475 = vshrl.u32 %v1474, 7
        %v1476 = vsub.s32 1, %v1475
        %v1477 = vrot.slane %v314, %v1476
        %v1480 = vmul.f32 %v1465, %v1473
        %v1481 = vmul.f32 %v1466, %v1477
        %v1482 = vmul.f32 %v1467, %v1473
        %v1483 = vmul.f32 %v1468, %v1477
        %v1484 = vadd.f32 %v1480, 0.0
        %v1485 = vadd.f32 %v1481, 0.0
        %v1486 = vadd.f32 %v1482, 0.0
        %v1487 = vadd.f32 %v1483, 0.0
        %v1488 = vld [vmem:[#allocation2 + $0x10] sm:$0xff]
        %v1489 = vld [vmem:[#allocation2 + $0x18] sm:$0xff]
        %v1490 = vld [vmem:[#allocation2 + $0x20] sm:$0xff]
        %v1491 = vld [vmem:[#allocation2 + $0x28] sm:$0xff]
        %v1492 = vld [vmem:[#allocation2 + $0x30] sm:$0xff]
        %v1493 = vld [vmem:[#allocation2 + $0x38] sm:$0xff]
        %v1494 = vld [vmem:[#allocation2 + $0x40] sm:$0xff]
        %v1495 = vld [vmem:[#allocation2 + $0x48] sm:$0xff]
        %v1496 = vld [vmem:[#allocation2 + $0x50] sm:$0xff]
        %v1497 = vld [vmem:[#allocation2 + $0x58] sm:$0xff]
        %v1498 = vld [vmem:[#allocation2 + $0x60] sm:$0xff]
        %v1499 = vld [vmem:[#allocation2 + $0x68] sm:$0xff]
        %v1500 = vld [vmem:[#allocation2 + $0x70] sm:$0xff]
        %v1501 = vld [vmem:[#allocation2 + $0x78] sm:$0xff]
        %v1502 = vld [vmem:[#allocation2 + $0x80] sm:$0xff]
        %v1503 = vld [vmem:[#allocation2 + $0x88] sm:$0xff]
        %v1504 = vld [vmem:[#allocation2 + $0x90] sm:$0xff]
        %v1505 = vld [vmem:[#allocation2 + $0x98] sm:$0xff]
        %v1506 = vld [vmem:[#allocation2 + $0xa0] sm:$0xff]
        %v1507 = vld [vmem:[#allocation2 + $0xa8] sm:$0xff]
        %v1508 = vld [vmem:[#allocation2 + $0xb0] sm:$0xff]
        %v1509 = vld [vmem:[#allocation2 + $0xb8] sm:$0xff]
        %v1510 = vld [vmem:[#allocation2 + $0xc0] sm:$0xff]
        %v1511 = vld [vmem:[#allocation2 + $0xc8] sm:$0xff]
        %v1512 = vld [vmem:[#allocation2 + $0xd0] sm:$0xff]
        %v1513 = vld [vmem:[#allocation2 + $0xd8] sm:$0xff]
        %v1514 = vld [vmem:[#allocation2 + $0xe0] sm:$0xff]
        %v1515 = vld [vmem:[#allocation2 + $0xe8] sm:$0xff]
        %v1516 = vld [vmem:[#allocation2 + $0xf0] sm:$0xff]
        %v1517 = vld [vmem:[#allocation2 + $0xf8] sm:$0xff]
        %v1518 = vld [vmem:[#allocation2 + $0x100] sm:$0xff]
        %v1519 = vld [vmem:[#allocation2 + $0x108] sm:$0xff]
        %v1520 = vld [vmem:[#allocation2 + $0x110] sm:$0xff]
        %v1521 = vld [vmem:[#allocation2 + $0x118] sm:$0xff]
        %v1522 = vld [vmem:[#allocation2 + $0x120] sm:$0xff]
        %v1523 = vld [vmem:[#allocation2 + $0x128] sm:$0xff]
        %s1524 = scalar_lea.vmem %s3, 16
        %v1525 = vld [vmem:[%s1524] sm:$0xff]
        %v1526 = vld [vmem:[%s1524 + $0x8] sm:$0xff]
        %s1527 = scalar_lea.vmem %s3, 64
        %v1528 = vld [vmem:[%s1527] sm:$0xff]
        %v1529 = vld [vmem:[%s1527 + $0x8] sm:$0xff]
        %v1531 = vsel %vm305, %v1528, 0
        %v1534 = vsel %vm305, %v1529, 0
        %v1537 = vsel %vm305, %v1490, 0
        %v1540 = vsel %vm305, %v1491, 0
        %v1543 = vsel %vm305, %v1492, 0
        %v1546 = vsel %vm305, %v1493, 0
        %v1549 = vsel %vm305, %v1494, 0
        %v1552 = vsel %vm305, %v1495, 0
        %v1555 = vsel %vm305, %v1496, 0
        %v1558 = vsel %vm305, %v1497, 0
        %v1561 = vsel %vm305, %v1498, 0
        %v1564 = vsel %vm305, %v1499, 0
        %v1567 = vsel %vm305, %v1500, 0
        %v1570 = vsel %vm305, %v1501, 0
        %v1573 = vsel %vm305, %v1502, 0
        %v1576 = vsel %vm305, %v1503, 0
        %v1579 = vsel %vm305, %v1504, 0
        %v1582 = vsel %vm305, %v1505, 0
        %v1585 = vsel %vm305, %v1506, 0
        %v1588 = vsel %vm305, %v1507, 0
        %v1591 = vsel %vm305, %v1508, 0
        %v1594 = vsel %vm305, %v1509, 0
        %v1597 = vsel %vm305, %v1510, 0
        %v1600 = vsel %vm305, %v1511, 0
        %v1603 = vsel %vm305, %v1512, 0
        %v1606 = vsel %vm305, %v1513, 0
        %v1609 = vsel %vm305, %v1514, 0
        %v1612 = vsel %vm305, %v1515, 0
        %v1615 = vsel %vm305, %v1516, 0
        %v1618 = vsel %vm305, %v1517, 0
        %v1621 = vsel %vm305, %v1518, 0
        %v1624 = vsel %vm305, %v1519, 0
        %v1627 = vsel %vm305, %v1520, 0
        %v1630 = vsel %vm305, %v1521, 0
        %1632 = vmatprep.subr.mxu0 0.0
        %1633 = vmatpush1.xpose.msra.mxu0 %v1537
        %1634 = vmatprep.subr.mxu0 0.0
        %1635 = vmatpush1.xpose.msra.mxu0 %v1540
        %1636 = vmatprep.subr.mxu0 0.0
        %1637 = vmatpush1.xpose.msra.mxu0 %v1543
        %1638 = vmatprep.subr.mxu0 0.0
        %1639 = vmatpush1.xpose.msra.mxu0 %v1546
        %1640 = vmatprep.subr.mxu0 0.0
        %1641 = vmatpush1.xpose.msra.mxu0 %v1549
        %1642 = vmatprep.subr.mxu0 0.0
        %1643 = vmatpush1.xpose.msra.mxu0 %v1552
        %1644 = vmatprep.subr.mxu0 0.0
        %1645 = vmatpush1.xpose.msra.mxu0 %v1555
        %1646 = vmatprep.subr.mxu0 0.0
        %1647 = vmatpush1.xpose.msra.mxu0 %v1558
        %1648 = vmatprep.subr.mxu0 0.0
        %1649 = vmatpush1.xpose.msra.mxu0 %v1561
        %1650 = vmatprep.subr.mxu0 0.0
        %1651 = vmatpush1.xpose.msra.mxu0 %v1564
        %1652 = vmatprep.subr.mxu0 0.0
        %1653 = vmatpush1.xpose.msra.mxu0 %v1567
        %1654 = vmatprep.subr.mxu0 0.0
        %1655 = vmatpush1.xpose.msra.mxu0 %v1570
        %1656 = vmatprep.subr.mxu0 0.0
        %1657 = vmatpush1.xpose.msra.mxu0 %v1573
        %1658 = vmatprep.subr.mxu0 0.0
        %1659 = vmatpush1.xpose.msra.mxu0 %v1576
        %1660 = vmatprep.subr.mxu0 0.0
        %1661 = vmatpush1.xpose.msra.mxu0 %v1579
        %1662 = vmatprep.subr.mxu0 0.0
        %1663 = vmatpush1.xpose.msra.mxu0 %v1582
        %1664 = vmatprep.subr.mxu0 0.0
        %1665 = vmatpush1.xpose.msra.mxu0 %v1585
        %1666 = vmatprep.subr.mxu0 0.0
        %1667 = vmatpush1.xpose.msra.mxu0 %v1588
        %1668 = vmatprep.subr.mxu0 0.0
        %1669 = vmatpush1.xpose.msra.mxu0 %v1591
        %1670 = vmatprep.subr.mxu0 0.0
        %1671 = vmatpush1.xpose.msra.mxu0 %v1594
        %1672 = vmatprep.subr.mxu0 0.0
        %1673 = vmatpush1.xpose.msra.mxu0 %v1597
        %1674 = vmatprep.subr.mxu0 0.0
        %1675 = vmatpush1.xpose.msra.mxu0 %v1600
        %1676 = vmatprep.subr.mxu0 0.0
        %1677 = vmatpush1.xpose.msra.mxu0 %v1603
        %1678 = vmatprep.subr.mxu0 0.0
        %1679 = vmatpush1.xpose.msra.mxu0 %v1606
        %1680 = vmatprep.subr.mxu0 0.0
        %1681 = vmatpush1.xpose.msra.mxu0 %v1609
        %1682 = vmatprep.subr.mxu0 0.0
        %1683 = vmatpush1.xpose.msra.mxu0 %v1612
        %1684 = vmatprep.subr.mxu0 0.0
        %1685 = vmatpush1.xpose.msra.mxu0 %v1615
        %1686 = vmatprep.subr.mxu0 0.0
        %1687 = vmatpush1.xpose.msra.mxu0 %v1618
        %1688 = vmatprep.subr.mxu0 0.0
        %1689 = vmatpush1.xpose.msra.mxu0 %v1621
        %1690 = vmatprep.subr.mxu0 0.0
        %1691 = vmatpush1.xpose.msra.mxu0 %v1624
        %1692 = vmatprep.subr.mxu0 0.0
        %1693 = vmatpush1.xpose.msra.mxu0 %v1627
        %1694 = vmatprep.subr.mxu0 0.0
        %1695 = vmatpush1.xpose.msra.mxu0 %v1630
        %1696 = vmatprep.mubr.f32.mxu0 0.0
        %1697 = vmatmul.mubr.f32.gmra.mrb[0].mxu0 %v1531
        %v1698 = vpop.f32.mrb[0].mxu0
        %v1699 = vadd.f32 0.0, %v1698
        %v1700 = vpop.f32.mrb[0].mxu0
        %v1701 = vadd.f32 0.0, %v1700
        %1702 = vmatprep.mubr.f32.mxu0 0.0
        %1703 = vmatmul.mubr.f32.gmra.mrb[0].mxu0 %v1534
        %v1704 = vpop.f32.mrb[0].mxu0
        %v1705 = vadd.f32 0.0, %v1704
        %v1706 = vpop.f32.mrb[0].mxu0
        %v1707 = vadd.f32 0.0, %v1706
        %1708 = vdwg.mxu0
        %v1710 = vsel %vm305, %v1525, 0
        %v1713 = vsel %vm305, %v1526, 0
        %v1716 = vsel %vm305, %v1488, 0
        %v1719 = vsel %vm305, %v1489, 0
        %1721 = vmatprep.subr.mxu0 0.0
        %1722 = vmatpush1.xpose.msra.mxu0 %v1716
        %1723 = vmatprep.subr.mxu0 0.0
        %1724 = vmatpush1.xpose.msra.mxu0 %v1719
        %1725 = vmatprep.subr.mxu0 0.0
        %1726 = vmatpush1.xpose.msra.mxu0 %v1537
        %1727 = vmatprep.subr.mxu0 0.0
        %1728 = vmatpush1.xpose.msra.mxu0 %v1540
        %1729 = vmatprep.subr.mxu0 0.0
        %1730 = vmatpush1.xpose.msra.mxu0 %v1543
        %1731 = vmatprep.subr.mxu0 0.0
        %1732 = vmatpush1.xpose.msra.mxu0 %v1546
        %1733 = vmatprep.subr.mxu0 0.0
        %1734 = vmatpush1.xpose.msra.mxu0 %v1549
        %1735 = vmatprep.subr.mxu0 0.0
        %1736 = vmatpush1.xpose.msra.mxu0 %v1552
        %1737 = vmatprep.subr.mxu0 0.0
        %1738 = vmatpush1.xpose.msra.mxu0 %v1555
        %1739 = vmatprep.subr.mxu0 0.0
        %1740 = vmatpush1.xpose.msra.mxu0 %v1558
        %1741 = vmatprep.subr.mxu0 0.0
        %1742 = vmatpush1.xpose.msra.mxu0 %v1561
        %1743 = vmatprep.subr.mxu0 0.0
        %1744 = vmatpush1.xpose.msra.mxu0 %v1564
        %1745 = vmatprep.subr.mxu0 0.0
        %1746 = vmatpush1.xpose.msra.mxu0 %v1567
        %1747 = vmatprep.subr.mxu0 0.0
        %1748 = vmatpush1.xpose.msra.mxu0 %v1570
        %1749 = vmatprep.subr.mxu0 0.0
        %1750 = vmatpush1.xpose.msra.mxu0 %v1573
        %1751 = vmatprep.subr.mxu0 0.0
        %1752 = vmatpush1.xpose.msra.mxu0 %v1576
        %1753 = vmatprep.subr.mxu0 0.0
        %1754 = vmatpush1.xpose.msra.mxu0 %v1579
        %1755 = vmatprep.subr.mxu0 0.0
        %1756 = vmatpush1.xpose.msra.mxu0 %v1582
        %1757 = vmatprep.subr.mxu0 0.0
        %1758 = vmatpush1.xpose.msra.mxu0 %v1585
        %1759 = vmatprep.subr.mxu0 0.0
        %1760 = vmatpush1.xpose.msra.mxu0 %v1588
        %1761 = vmatprep.subr.mxu0 0.0
        %1762 = vmatpush1.xpose.msra.mxu0 %v1591
        %1763 = vmatprep.subr.mxu0 0.0
        %1764 = vmatpush1.xpose.msra.mxu0 %v1594
        %1765 = vmatprep.subr.mxu0 0.0
        %1766 = vmatpush1.xpose.msra.mxu0 %v1597
        %1767 = vmatprep.subr.mxu0 0.0
        %1768 = vmatpush1.xpose.msra.mxu0 %v1600
        %1769 = vmatprep.subr.mxu0 0.0
        %1770 = vmatpush1.xpose.msra.mxu0 %v1603
        %1771 = vmatprep.subr.mxu0 0.0
        %1772 = vmatpush1.xpose.msra.mxu0 %v1606
        %1773 = vmatprep.subr.mxu0 0.0
        %1774 = vmatpush1.xpose.msra.mxu0 %v1609
        %1775 = vmatprep.subr.mxu0 0.0
        %1776 = vmatpush1.xpose.msra.mxu0 %v1612
        %1777 = vmatprep.subr.mxu0 0.0
        %1778 = vmatpush1.xpose.msra.mxu0 %v1615
        %1779 = vmatprep.subr.mxu0 0.0
        %1780 = vmatpush1.xpose.msra.mxu0 %v1618
        %1781 = vmatprep.subr.mxu0 0.0
        %1782 = vmatpush1.xpose.msra.mxu0 %v1621
        %1783 = vmatprep.subr.mxu0 0.0
        %1784 = vmatpush1.xpose.msra.mxu0 %v1624
        %1785 = vmatprep.mubr.f32.mxu0 0.0
        %1786 = vmatmul.mubr.f32.gmra.mrb[0].mxu0 %v1710
        %v1787 = vpop.f32.mrb[0].mxu0
        %v1788 = vadd.f32 %v1699, %v1787
        %v1789 = vpop.f32.mrb[0].mxu0
        %v1790 = vadd.f32 %v1701, %v1789
        %1791 = vmatprep.mubr.f32.mxu0 0.0
        %1792 = vmatmul.mubr.f32.gmra.mrb[0].mxu0 %v1713
        %v1793 = vpop.f32.mrb[0].mxu0
        %v1794 = vadd.f32 %v1705, %v1793
        %v1795 = vpop.f32.mrb[0].mxu0
        %v1796 = vadd.f32 %v1707, %v1795
        %1797 = vdwg.mxu0
        %s1798 = scalar_lea.vmem %s3, 112
        %v1799 = vld [vmem:[%s1798] sm:$0xff]
        %v1800 = vld [vmem:[%s1798 + $0x8] sm:$0xff]
        %v1802 = vsel %vm305, %v1799, 0
        %v1805 = vsel %vm305, %v1800, 0
        %v1808 = vsel %vm305, %v1522, 0
        %v1811 = vsel %vm305, %v1523, 0
        %1813 = vmatprep.subr.mxu0 0.0
        %1814 = vmatpush1.xpose.msra.mxu0 %v1543
        %1815 = vmatprep.subr.mxu0 0.0
        %1816 = vmatpush1.xpose.msra.mxu0 %v1546
        %1817 = vmatprep.subr.mxu0 0.0
        %1818 = vmatpush1.xpose.msra.mxu0 %v1549
        %1819 = vmatprep.subr.mxu0 0.0
        %1820 = vmatpush1.xpose.msra.mxu0 %v1552
        %1821 = vmatprep.subr.mxu0 0.0
        %1822 = vmatpush1.xpose.msra.mxu0 %v1555
        %1823 = vmatprep.subr.mxu0 0.0
        %1824 = vmatpush1.xpose.msra.mxu0 %v1558
        %1825 = vmatprep.subr.mxu0 0.0
        %1826 = vmatpush1.xpose.msra.mxu0 %v1561
        %1827 = vmatprep.subr.mxu0 0.0
        %1828 = vmatpush1.xpose.msra.mxu0 %v1564
        %1829 = vmatprep.subr.mxu0 0.0
        %1830 = vmatpush1.xpose.msra.mxu0 %v1567
        %1831 = vmatprep.subr.mxu0 0.0
        %1832 = vmatpush1.xpose.msra.mxu0 %v1570
        %1833 = vmatprep.subr.mxu0 0.0
        %1834 = vmatpush1.xpose.msra.mxu0 %v1573
        %1835 = vmatprep.subr.mxu0 0.0
        %1836 = vmatpush1.xpose.msra.mxu0 %v1576
        %1837 = vmatprep.subr.mxu0 0.0
        %1838 = vmatpush1.xpose.msra.mxu0 %v1579
        %1839 = vmatprep.subr.mxu0 0.0
        %1840 = vmatpush1.xpose.msra.mxu0 %v1582
        %1841 = vmatprep.subr.mxu0 0.0
        %1842 = vmatpush1.xpose.msra.mxu0 %v1585
        %1843 = vmatprep.subr.mxu0 0.0
        %1844 = vmatpush1.xpose.msra.mxu0 %v1588
        %1845 = vmatprep.subr.mxu0 0.0
        %1846 = vmatpush1.xpose.msra.mxu0 %v1591
        %1847 = vmatprep.subr.mxu0 0.0
        %1848 = vmatpush1.xpose.msra.mxu0 %v1594
        %1849 = vmatprep.subr.mxu0 0.0
        %1850 = vmatpush1.xpose.msra.mxu0 %v1597
        %1851 = vmatprep.subr.mxu0 0.0
        %1852 = vmatpush1.xpose.msra.mxu0 %v1600
        %1853 = vmatprep.subr.mxu0 0.0
        %1854 = vmatpush1.xpose.msra.mxu0 %v1603
        %1855 = vmatprep.subr.mxu0 0.0
        %1856 = vmatpush1.xpose.msra.mxu0 %v1606
        %1857 = vmatprep.subr.mxu0 0.0
        %1858 = vmatpush1.xpose.msra.mxu0 %v1609
        %1859 = vmatprep.subr.mxu0 0.0
        %1860 = vmatpush1.xpose.msra.mxu0 %v1612
        %1861 = vmatprep.subr.mxu0 0.0
        %1862 = vmatpush1.xpose.msra.mxu0 %v1615
        %1863 = vmatprep.subr.mxu0 0.0
        %1864 = vmatpush1.xpose.msra.mxu0 %v1618
        %1865 = vmatprep.subr.mxu0 0.0
        %1866 = vmatpush1.xpose.msra.mxu0 %v1621
        %1867 = vmatprep.subr.mxu0 0.0
        %1868 = vmatpush1.xpose.msra.mxu0 %v1624
        %1869 = vmatprep.subr.mxu0 0.0
        %1870 = vmatpush1.xpose.msra.mxu0 %v1627
        %1871 = vmatprep.subr.mxu0 0.0
        %1872 = vmatpush1.xpose.msra.mxu0 %v1630
        %1873 = vmatprep.subr.mxu0 0.0
        %1874 = vmatpush1.xpose.msra.mxu0 %v1808
        %1875 = vmatprep.subr.mxu0 0.0
        %1876 = vmatpush1.xpose.msra.mxu0 %v1811
        %1877 = vmatprep.mubr.f32.mxu0 0.0
        %1878 = vmatmul.mubr.f32.gmra.mrb[0].mxu0 %v1802
        %v1879 = vpop.f32.mrb[0].mxu0
        %v1880 = vadd.f32 0.0, %v1879
        %v1881 = vpop.f32.mrb[0].mxu0
        %v1882 = vadd.f32 0.0, %v1881
        %1883 = vmatprep.mubr.f32.mxu0 0.0
        %1884 = vmatmul.mubr.f32.gmra.mrb[0].mxu0 %v1805
        %v1885 = vpop.f32.mrb[0].mxu0
        %v1886 = vadd.f32 0.0, %v1885
        %v1887 = vpop.f32.mrb[0].mxu0
        %v1888 = vadd.f32 0.0, %v1887
        %1889 = vdwg.mxu0
        %v1890 = vadd.f32 %v1788, %v1880
        %v1891 = vadd.f32 %v1790, %v1882
        %v1892 = vadd.f32 %v1794, %v1886
        %v1893 = vadd.f32 %v1796, %v1888
        %v1894 = vadd.f32 %v1484, %v1890
        %v1895 = vadd.f32 %v1485, %v1891
        %v1896 = vadd.f32 %v1486, %v1892
        %v1897 = vadd.f32 %v1487, %v1893
        %v1898 = vld [vmem:[#allocation2 + $0x11] sm:$0xff]
        %v1899 = vld [vmem:[#allocation2 + $0x19] sm:$0xff]
        %v1900 = vld [vmem:[#allocation2 + $0x21] sm:$0xff]
        %v1901 = vld [vmem:[#allocation2 + $0x29] sm:$0xff]
        %v1902 = vld [vmem:[#allocation2 + $0x31] sm:$0xff]
        %v1903 = vld [vmem:[#allocation2 + $0x39] sm:$0xff]
        %v1904 = vld [vmem:[#allocation2 + $0x41] sm:$0xff]
        %v1905 = vld [vmem:[#allocation2 + $0x49] sm:$0xff]
        %v1906 = vld [vmem:[#allocation2 + $0x51] sm:$0xff]
        %v1907 = vld [vmem:[#allocation2 + $0x59] sm:$0xff]
        %v1908 = vld [vmem:[#allocation2 + $0x61] sm:$0xff]
        %v1909 = vld [vmem:[#allocation2 + $0x69] sm:$0xff]
        %v1910 = vld [vmem:[#allocation2 + $0x71] sm:$0xff]
        %v1911 = vld [vmem:[#allocation2 + $0x79] sm:$0xff]
        %v1912 = vld [vmem:[#allocation2 + $0x81] sm:$0xff]
        %v1913 = vld [vmem:[#allocation2 + $0x89] sm:$0xff]
        %v1914 = vld [vmem:[#allocation2 + $0x91] sm:$0xff]
        %v1915 = vld [vmem:[#allocation2 + $0x99] sm:$0xff]
        %v1916 = vld [vmem:[#allocation2 + $0xa1] sm:$0xff]
        %v1917 = vld [vmem:[#allocation2 + $0xa9] sm:$0xff]
        %v1918 = vld [vmem:[#allocation2 + $0xb1] sm:$0xff]
        %v1919 = vld [vmem:[#allocation2 + $0xb9] sm:$0xff]
        %v1920 = vld [vmem:[#allocation2 + $0xc1] sm:$0xff]
        %v1921 = vld [vmem:[#allocation2 + $0xc9] sm:$0xff]
        %v1922 = vld [vmem:[#allocation2 + $0xd1] sm:$0xff]
        %v1923 = vld [vmem:[#allocation2 + $0xd9] sm:$0xff]
        %v1924 = vld [vmem:[#allocation2 + $0xe1] sm:$0xff]
        %v1925 = vld [vmem:[#allocation2 + $0xe9] sm:$0xff]
        %v1926 = vld [vmem:[#allocation2 + $0xf1] sm:$0xff]
        %v1927 = vld [vmem:[#allocation2 + $0xf9] sm:$0xff]
        %v1928 = vld [vmem:[#allocation2 + $0x101] sm:$0xff]
        %v1929 = vld [vmem:[#allocation2 + $0x109] sm:$0xff]
        %v1930 = vld [vmem:[#allocation2 + $0x111] sm:$0xff]
        %v1931 = vld [vmem:[#allocation2 + $0x119] sm:$0xff]
        %v1932 = vld [vmem:[#allocation2 + $0x121] sm:$0xff]
        %v1933 = vld [vmem:[#allocation2 + $0x129] sm:$0xff]
        %s1934 = scalar_lea.vmem %s3, 32
        %v1935 = vld [vmem:[%s1934] sm:$0xff]
        %v1936 = vld [vmem:[%s1934 + $0x8] sm:$0xff]
        %s1937 = scalar_lea.vmem %s3, 80
        %v1938 = vld [vmem:[%s1937] sm:$0xff]
        %v1939 = vld [vmem:[%s1937 + $0x8] sm:$0xff]
        %v1941 = vsel %vm305, %v1938, 0
        %v1944 = vsel %vm305, %v1939, 0
        %v1947 = vsel %vm305, %v1900, 0
        %v1950 = vsel %vm305, %v1901, 0
        %v1953 = vsel %vm305, %v1902, 0
        %v1956 = vsel %vm305, %v1903, 0
        %v1959 = vsel %vm305, %v1904, 0
        %v1962 = vsel %vm305, %v1905, 0
        %v1965 = vsel %vm305, %v1906, 0
        %v1968 = vsel %vm305, %v1907, 0
        %v1971 = vsel %vm305, %v1908, 0
        %v1974 = vsel %vm305, %v1909, 0
        %v1977 = vsel %vm305, %v1910, 0
        %v1980 = vsel %vm305, %v1911, 0
        %v1983 = vsel %vm305, %v1912, 0
        %v1986 = vsel %vm305, %v1913, 0
        %v1989 = vsel %vm305, %v1914, 0
        %v1992 = vsel %vm305, %v1915, 0
        %v1995 = vsel %vm305, %v1916, 0
        %v1998 = vsel %vm305, %v1917, 0
        %v2001 = vsel %vm305, %v1918, 0
        %v2004 = vsel %vm305, %v1919, 0
        %v2007 = vsel %vm305, %v1920, 0
        %v2010 = vsel %vm305, %v1921, 0
        %v2013 = vsel %vm305, %v1922, 0
        %v2016 = vsel %vm305, %v1923, 0
        %v2019 = vsel %vm305, %v1924, 0
        %v2022 = vsel %vm305, %v1925, 0
        %v2025 = vsel %vm305, %v1926, 0
        %v2028 = vsel %vm305, %v1927, 0
        %v2031 = vsel %vm305, %v1928, 0
        %v2034 = vsel %vm305, %v1929, 0
        %v2037 = vsel %vm305, %v1930, 0
        %v2040 = vsel %vm305, %v1931, 0
        %2042 = vmatprep.subr.mxu0 0.0
        %2043 = vmatpush1.xpose.msra.mxu0 %v1947
        %2044 = vmatprep.subr.mxu0 0.0
        %2045 = vmatpush1.xpose.msra.mxu0 %v1950
        %2046 = vmatprep.subr.mxu0 0.0
        %2047 = vmatpush1.xpose.msra.mxu0 %v1953
        %2048 = vmatprep.subr.mxu0 0.0
        %2049 = vmatpush1.xpose.msra.mxu0 %v1956
        %2050 = vmatprep.subr.mxu0 0.0
        %2051 = vmatpush1.xpose.msra.mxu0 %v1959
        %2052 = vmatprep.subr.mxu0 0.0
        %2053 = vmatpush1.xpose.msra.mxu0 %v1962
        %2054 = vmatprep.subr.mxu0 0.0
        %2055 = vmatpush1.xpose.msra.mxu0 %v1965
        %2056 = vmatprep.subr.mxu0 0.0
        %2057 = vmatpush1.xpose.msra.mxu0 %v1968
        %2058 = vmatprep.subr.mxu0 0.0
        %2059 = vmatpush1.xpose.msra.mxu0 %v1971
        %2060 = vmatprep.subr.mxu0 0.0
        %2061 = vmatpush1.xpose.msra.mxu0 %v1974
        %2062 = vmatprep.subr.mxu0 0.0
        %2063 = vmatpush1.xpose.msra.mxu0 %v1977
        %2064 = vmatprep.subr.mxu0 0.0
        %2065 = vmatpush1.xpose.msra.mxu0 %v1980
        %2066 = vmatprep.subr.mxu0 0.0
        %2067 = vmatpush1.xpose.msra.mxu0 %v1983
        %2068 = vmatprep.subr.mxu0 0.0
        %2069 = vmatpush1.xpose.msra.mxu0 %v1986
        %2070 = vmatprep.subr.mxu0 0.0
        %2071 = vmatpush1.xpose.msra.mxu0 %v1989
        %2072 = vmatprep.subr.mxu0 0.0
        %2073 = vmatpush1.xpose.msra.mxu0 %v1992
        %2074 = vmatprep.subr.mxu0 0.0
        %2075 = vmatpush1.xpose.msra.mxu0 %v1995
        %2076 = vmatprep.subr.mxu0 0.0
        %2077 = vmatpush1.xpose.msra.mxu0 %v1998
        %2078 = vmatprep.subr.mxu0 0.0
        %2079 = vmatpush1.xpose.msra.mxu0 %v2001
        %2080 = vmatprep.subr.mxu0 0.0
        %2081 = vmatpush1.xpose.msra.mxu0 %v2004
        %2082 = vmatprep.subr.mxu0 0.0
        %2083 = vmatpush1.xpose.msra.mxu0 %v2007
        %2084 = vmatprep.subr.mxu0 0.0
        %2085 = vmatpush1.xpose.msra.mxu0 %v2010
        %2086 = vmatprep.subr.mxu0 0.0
        %2087 = vmatpush1.xpose.msra.mxu0 %v2013
        %2088 = vmatprep.subr.mxu0 0.0
        %2089 = vmatpush1.xpose.msra.mxu0 %v2016
        %2090 = vmatprep.subr.mxu0 0.0
        %2091 = vmatpush1.xpose.msra.mxu0 %v2019
        %2092 = vmatprep.subr.mxu0 0.0
        %2093 = vmatpush1.xpose.msra.mxu0 %v2022
        %2094 = vmatprep.subr.mxu0 0.0
        %2095 = vmatpush1.xpose.msra.mxu0 %v2025
        %2096 = vmatprep.subr.mxu0 0.0
        %2097 = vmatpush1.xpose.msra.mxu0 %v2028
        %2098 = vmatprep.subr.mxu0 0.0
        %2099 = vmatpush1.xpose.msra.mxu0 %v2031
        %2100 = vmatprep.subr.mxu0 0.0
        %2101 = vmatpush1.xpose.msra.mxu0 %v2034
        %2102 = vmatprep.subr.mxu0 0.0
        %2103 = vmatpush1.xpose.msra.mxu0 %v2037
        %2104 = vmatprep.subr.mxu0 0.0
        %2105 = vmatpush1.xpose.msra.mxu0 %v2040
        %2106 = vmatprep.mubr.f32.mxu0 0.0
        %2107 = vmatmul.mubr.f32.gmra.mrb[0].mxu0 %v1941
        %v2108 = vpop.f32.mrb[0].mxu0
        %v2109 = vadd.f32 0.0, %v2108
        %v2110 = vpop.f32.mrb[0].mxu0
        %v2111 = vadd.f32 0.0, %v2110
        %2112 = vmatprep.mubr.f32.mxu0 0.0
        %2113 = vmatmul.mubr.f32.gmra.mrb[0].mxu0 %v1944
        %v2114 = vpop.f32.mrb[0].mxu0
        %v2115 = vadd.f32 0.0, %v2114
        %v2116 = vpop.f32.mrb[0].mxu0
        %v2117 = vadd.f32 0.0, %v2116
        %2118 = vdwg.mxu0
        %v2120 = vsel %vm305, %v1935, 0
        %v2123 = vsel %vm305, %v1936, 0
        %v2126 = vsel %vm305, %v1898, 0
        %v2129 = vsel %vm305, %v1899, 0
        %2131 = vmatprep.subr.mxu0 0.0
        %2132 = vmatpush1.xpose.msra.mxu0 %v2126
        %2133 = vmatprep.subr.mxu0 0.0
        %2134 = vmatpush1.xpose.msra.mxu0 %v2129
        %2135 = vmatprep.subr.mxu0 0.0
        %2136 = vmatpush1.xpose.msra.mxu0 %v1947
        %2137 = vmatprep.subr.mxu0 0.0
        %2138 = vmatpush1.xpose.msra.mxu0 %v1950
        %2139 = vmatprep.subr.mxu0 0.0
        %2140 = vmatpush1.xpose.msra.mxu0 %v1953
        %2141 = vmatprep.subr.mxu0 0.0
        %2142 = vmatpush1.xpose.msra.mxu0 %v1956
        %2143 = vmatprep.subr.mxu0 0.0
        %2144 = vmatpush1.xpose.msra.mxu0 %v1959
        %2145 = vmatprep.subr.mxu0 0.0
        %2146 = vmatpush1.xpose.msra.mxu0 %v1962
        %2147 = vmatprep.subr.mxu0 0.0
        %2148 = vmatpush1.xpose.msra.mxu0 %v1965
        %2149 = vmatprep.subr.mxu0 0.0
        %2150 = vmatpush1.xpose.msra.mxu0 %v1968
        %2151 = vmatprep.subr.mxu0 0.0
        %2152 = vmatpush1.xpose.msra.mxu0 %v1971
        %2153 = vmatprep.subr.mxu0 0.0
        %2154 = vmatpush1.xpose.msra.mxu0 %v1974
        %2155 = vmatprep.subr.mxu0 0.0
        %2156 = vmatpush1.xpose.msra.mxu0 %v1977
        %2157 = vmatprep.subr.mxu0 0.0
        %2158 = vmatpush1.xpose.msra.mxu0 %v1980
        %2159 = vmatprep.subr.mxu0 0.0
        %2160 = vmatpush1.xpose.msra.mxu0 %v1983
        %2161 = vmatprep.subr.mxu0 0.0
        %2162 = vmatpush1.xpose.msra.mxu0 %v1986
        %2163 = vmatprep.subr.mxu0 0.0
        %2164 = vmatpush1.xpose.msra.mxu0 %v1989
        %2165 = vmatprep.subr.mxu0 0.0
        %2166 = vmatpush1.xpose.msra.mxu0 %v1992
        %2167 = vmatprep.subr.mxu0 0.0
        %2168 = vmatpush1.xpose.msra.mxu0 %v1995
        %2169 = vmatprep.subr.mxu0 0.0
        %2170 = vmatpush1.xpose.msra.mxu0 %v1998
        %2171 = vmatprep.subr.mxu0 0.0
        %2172 = vmatpush1.xpose.msra.mxu0 %v2001
        %2173 = vmatprep.subr.mxu0 0.0
        %2174 = vmatpush1.xpose.msra.mxu0 %v2004
        %2175 = vmatprep.subr.mxu0 0.0
        %2176 = vmatpush1.xpose.msra.mxu0 %v2007
        %2177 = vmatprep.subr.mxu0 0.0
        %2178 = vmatpush1.xpose.msra.mxu0 %v2010
        %2179 = vmatprep.subr.mxu0 0.0
        %2180 = vmatpush1.xpose.msra.mxu0 %v2013
        %2181 = vmatprep.subr.mxu0 0.0
        %2182 = vmatpush1.xpose.msra.mxu0 %v2016
        %2183 = vmatprep.subr.mxu0 0.0
        %2184 = vmatpush1.xpose.msra.mxu0 %v2019
        %2185 = vmatprep.subr.mxu0 0.0
        %2186 = vmatpush1.xpose.msra.mxu0 %v2022
        %2187 = vmatprep.subr.mxu0 0.0
        %2188 = vmatpush1.xpose.msra.mxu0 %v2025
        %2189 = vmatprep.subr.mxu0 0.0
        %2190 = vmatpush1.xpose.msra.mxu0 %v2028
        %2191 = vmatprep.subr.mxu0 0.0
        %2192 = vmatpush1.xpose.msra.mxu0 %v2031
        %2193 = vmatprep.subr.mxu0 0.0
        %2194 = vmatpush1.xpose.msra.mxu0 %v2034
        %2195 = vmatprep.mubr.f32.mxu0 0.0
        %2196 = vmatmul.mubr.f32.gmra.mrb[0].mxu0 %v2120
        %v2197 = vpop.f32.mrb[0].mxu0
        %v2198 = vadd.f32 %v2109, %v2197
        %v2199 = vpop.f32.mrb[0].mxu0
        %v2200 = vadd.f32 %v2111, %v2199
        %2201 = vmatprep.mubr.f32.mxu0 0.0
        %2202 = vmatmul.mubr.f32.gmra.mrb[0].mxu0 %v2123
        %v2203 = vpop.f32.mrb[0].mxu0
        %v2204 = vadd.f32 %v2115, %v2203
        %v2205 = vpop.f32.mrb[0].mxu0
        %v2206 = vadd.f32 %v2117, %v2205
        %2207 = vdwg.mxu0
        %s2208 = scalar_lea.vmem %s3, 128
        %v2209 = vld [vmem:[%s2208] sm:$0xff]
        %v2210 = vld [vmem:[%s2208 + $0x8] sm:$0xff]
        %v2212 = vsel %vm305, %v2209, 0
        %v2215 = vsel %vm305, %v2210, 0
        %v2218 = vsel %vm305, %v1932, 0
        %v2221 = vsel %vm305, %v1933, 0
        %2223 = vmatprep.subr.mxu0 0.0
        %2224 = vmatpush1.xpose.msra.mxu0 %v1953
        %2225 = vmatprep.subr.mxu0 0.0
        %2226 = vmatpush1.xpose.msra.mxu0 %v1956
        %2227 = vmatprep.subr.mxu0 0.0
        %2228 = vmatpush1.xpose.msra.mxu0 %v1959
        %2229 = vmatprep.subr.mxu0 0.0
        %2230 = vmatpush1.xpose.msra.mxu0 %v1962
        %2231 = vmatprep.subr.mxu0 0.0
        %2232 = vmatpush1.xpose.msra.mxu0 %v1965
        %2233 = vmatprep.subr.mxu0 0.0
        %2234 = vmatpush1.xpose.msra.mxu0 %v1968
        %2235 = vmatprep.subr.mxu0 0.0
        %2236 = vmatpush1.xpose.msra.mxu0 %v1971
        %2237 = vmatprep.subr.mxu0 0.0
        %2238 = vmatpush1.xpose.msra.mxu0 %v1974
        %2239 = vmatprep.subr.mxu0 0.0
        %2240 = vmatpush1.xpose.msra.mxu0 %v1977
        %2241 = vmatprep.subr.mxu0 0.0
        %2242 = vmatpush1.xpose.msra.mxu0 %v1980
        %2243 = vmatprep.subr.mxu0 0.0
        %2244 = vmatpush1.xpose.msra.mxu0 %v1983
        %2245 = vmatprep.subr.mxu0 0.0
        %2246 = vmatpush1.xpose.msra.mxu0 %v1986
        %2247 = vmatprep.subr.mxu0 0.0
        %2248 = vmatpush1.xpose.msra.mxu0 %v1989
        %2249 = vmatprep.subr.mxu0 0.0
        %2250 = vmatpush1.xpose.msra.mxu0 %v1992
        %2251 = vmatprep.subr.mxu0 0.0
        %2252 = vmatpush1.xpose.msra.mxu0 %v1995
        %2253 = vmatprep.subr.mxu0 0.0
        %2254 = vmatpush1.xpose.msra.mxu0 %v1998
        %2255 = vmatprep.subr.mxu0 0.0
        %2256 = vmatpush1.xpose.msra.mxu0 %v2001
        %2257 = vmatprep.subr.mxu0 0.0
        %2258 = vmatpush1.xpose.msra.mxu0 %v2004
        %2259 = vmatprep.subr.mxu0 0.0
        %2260 = vmatpush1.xpose.msra.mxu0 %v2007
        %2261 = vmatprep.subr.mxu0 0.0
        %2262 = vmatpush1.xpose.msra.mxu0 %v2010
        %2263 = vmatprep.subr.mxu0 0.0
        %2264 = vmatpush1.xpose.msra.mxu0 %v2013
        %2265 = vmatprep.subr.mxu0 0.0
        %2266 = vmatpush1.xpose.msra.mxu0 %v2016
        %2267 = vmatprep.subr.mxu0 0.0
        %2268 = vmatpush1.xpose.msra.mxu0 %v2019
        %2269 = vmatprep.subr.mxu0 0.0
        %2270 = vmatpush1.xpose.msra.mxu0 %v2022
        %2271 = vmatprep.subr.mxu0 0.0
        %2272 = vmatpush1.xpose.msra.mxu0 %v2025
        %2273 = vmatprep.subr.mxu0 0.0
        %2274 = vmatpush1.xpose.msra.mxu0 %v2028
        %2275 = vmatprep.subr.mxu0 0.0
        %2276 = vmatpush1.xpose.msra.mxu0 %v2031
        %2277 = vmatprep.subr.mxu0 0.0
        %2278 = vmatpush1.xpose.msra.mxu0 %v2034
        %2279 = vmatprep.subr.mxu0 0.0
        %2280 = vmatpush1.xpose.msra.mxu0 %v2037
        %2281 = vmatprep.subr.mxu0 0.0
        %2282 = vmatpush1.xpose.msra.mxu0 %v2040
        %2283 = vmatprep.subr.mxu0 0.0
        %2284 = vmatpush1.xpose.msra.mxu0 %v2218
        %2285 = vmatprep.subr.mxu0 0.0
        %2286 = vmatpush1.xpose.msra.mxu0 %v2221
        %2287 = vmatprep.mubr.f32.mxu0 0.0
        %2288 = vmatmul.mubr.f32.gmra.mrb[0].mxu0 %v2212
        %v2289 = vpop.f32.mrb[0].mxu0
        %v2290 = vadd.f32 0.0, %v2289
        %v2291 = vpop.f32.mrb[0].mxu0
        %v2292 = vadd.f32 0.0, %v2291
        %2293 = vmatprep.mubr.f32.mxu0 0.0
        %2294 = vmatmul.mubr.f32.gmra.mrb[0].mxu0 %v2215
        %v2295 = vpop.f32.mrb[0].mxu0
        %v2296 = vadd.f32 0.0, %v2295
        %v2297 = vpop.f32.mrb[0].mxu0
        %v2298 = vadd.f32 0.0, %v2297
        %2299 = vdwg.mxu0
        %v2300 = vadd.f32 %v2198, %v2290
        %v2301 = vadd.f32 %v2200, %v2292
        %v2302 = vadd.f32 %v2204, %v2296
        %v2303 = vadd.f32 %v2206, %v2298
        %v2305 = vlaneseq
        %v2306 = vshrl.u32 %v2305, 7
        %v2307 = vsub.s32 0, %v2306
        %v2308 = vrot.slane %v316, %v2307
        %v2309 = vlaneseq
        %v2310 = vshrl.u32 %v2309, 7
        %v2311 = vsub.s32 1, %v2310
        %v2312 = vrot.slane %v316, %v2311
        %v2315 = vmul.f32 %v2300, %v2308
        %v2316 = vmul.f32 %v2301, %v2312
        %v2317 = vmul.f32 %v2302, %v2308
        %v2318 = vmul.f32 %v2303, %v2312
        %v2319 = vadd.f32 %v1894, %v2315
        %v2320 = vadd.f32 %v1895, %v2316
        %v2321 = vadd.f32 %v1896, %v2317
        %v2322 = vadd.f32 %v1897, %v2318
        %v2323 = vadd.f32 %v2319, %v2320
        %2324 = vadd.xlane.f32.xlu0 %v2323
        %v2325 = vpop.xlane.xlu0 %2324
        %v2326 = vadd.f32 %v2321, %v2322
        %2327 = vadd.xlane.f32.xlu0 %v2326
        %v2328 = vpop.xlane.xlu0 %2327
        %v2329 = vmul.f32 %v2325, %v891
        %v2330 = vmul.f32 %v2328, %v891
        %v2331 = vmul.f32 %v2319, %v2319
        %v2332 = vmul.f32 %v2320, %v2320
        %v2333 = vmul.f32 %v2321, %v2321
        %v2334 = vmul.f32 %v2322, %v2322
        %v2335 = vadd.f32 %v2331, %v2332
        %2336 = vadd.xlane.f32.xlu0 %v2335
        %v2337 = vpop.xlane.xlu0 %2336
        %v2338 = vadd.f32 %v2333, %v2334
        %2339 = vadd.xlane.f32.xlu0 %v2338
        %v2340 = vpop.xlane.xlu0 %2339
        %v2341 = vmul.f32 %v2337, %v891
        %v2342 = vmul.f32 %v2340, %v891
        %v2343 = vmul.f32 %v2329, %v2329
        %v2344 = vmul.f32 %v2330, %v2330
        %v2345 = vsub.f32 %v2341, %v2343
        %v2346 = vsub.f32 %v2342, %v2344
        %v2347 = vsub.f32 %v2319, %v2329
        %v2348 = vsub.f32 %v2320, %v2329
        %v2349 = vsub.f32 %v2321, %v2330
        %v2350 = vsub.f32 %v2322, %v2330
        %v2351 = vadd.f32 %v2345, 1e-05
        %v2352 = vadd.f32 %v2346, 1e-05
        %v2353 = vrsqrt.pop %v2351
        %v2354 = vrsqrt.pop %v2352
        %v2355 = vmul.f32 %v2347, %v2353
        %v2356 = vmul.f32 %v2348, %v2353
        %v2357 = vmul.f32 %v2349, %v2354
        %v2358 = vmul.f32 %v2350, %v2354
        %v2359 = vmul.f32 %v2355, 0.01
        %v2360 = vmul.f32 %v2356, 0.01
        %v2361 = vmul.f32 %v2357, 0.01
        %v2362 = vmul.f32 %v2358, 0.01
        %v2363 = vmax.f32 %v2355, %v2359
        %v2364 = vmax.f32 %v2356, %v2360
        %v2365 = vmax.f32 %v2357, %v2361
        %v2366 = vmax.f32 %v2358, %v2362
        %v2367 = vld [vmem:[%s4] sm:$0xff]
        %vm2368 = vcmask 130048
        %v2370 = vsel %vm2368, %v2367, 0
        %2372 = vmatprep.subr.mxu0 %v2364
        %2373 = vmatpush1.msra.mxu0 %v2363
        %2374 = vmatprep.subr.mxu0 %v2366
        %2375 = vmatpush1.msra.mxu0 %v2365
        %2376 = vmatprep.subr.mxu0 0.0
        %2377 = vmatpush1.msra.mxu0 0.0
        %2378 = vmatprep.subr.mxu0 0.0
        %2379 = vmatpush1.msra.mxu0 0.0
        %2380 = vmatprep.subr.mxu0 0.0
        %2381 = vmatpush1.msra.mxu0 0.0
        %2382 = vmatprep.subr.mxu0 0.0
        %2383 = vmatpush1.msra.mxu0 0.0
        %2384 = vmatprep.subr.mxu0 0.0
        %2385 = vmatpush1.msra.mxu0 0.0
        %2386 = vmatprep.subr.mxu0 0.0
        %2387 = vmatpush1.msra.mxu0 0.0
        %2388 = vmatprep.subr.mxu0 0.0
        %2389 = vmatpush1.msra.mxu0 0.0
        %2390 = vmatprep.subr.mxu0 0.0
        %2391 = vmatpush1.msra.mxu0 0.0
        %2392 = vmatprep.subr.mxu0 0.0
        %2393 = vmatpush1.msra.mxu0 0.0
        %2394 = vmatprep.subr.mxu0 0.0
        %2395 = vmatpush1.msra.mxu0 0.0
        %2396 = vmatprep.subr.mxu0 0.0
        %2397 = vmatpush1.msra.mxu0 0.0
        %2398 = vmatprep.subr.mxu0 0.0
        %2399 = vmatpush1.msra.mxu0 0.0
        %2400 = vmatprep.subr.mxu0 0.0
        %2401 = vmatpush1.msra.mxu0 0.0
        %2402 = vmatprep.subr.mxu0 0.0
        %2403 = vmatpush1.msra.mxu0 0.0
        %2404 = vmatprep.subr.mxu0 0.0
        %2405 = vmatpush1.msra.mxu0 0.0
        %2406 = vmatprep.subr.mxu0 0.0
        %2407 = vmatpush1.msra.mxu0 0.0
        %2408 = vmatprep.subr.mxu0 0.0
        %2409 = vmatpush1.msra.mxu0 0.0
        %2410 = vmatprep.subr.mxu0 0.0
        %2411 = vmatpush1.msra.mxu0 0.0
        %2412 = vmatprep.subr.mxu0 0.0
        %2413 = vmatpush1.msra.mxu0 0.0
        %2414 = vmatprep.subr.mxu0 0.0
        %2415 = vmatpush1.msra.mxu0 0.0
        %2416 = vmatprep.subr.mxu0 0.0
        %2417 = vmatpush1.msra.mxu0 0.0
        %2418 = vmatprep.subr.mxu0 0.0
        %2419 = vmatpush1.msra.mxu0 0.0
        %2420 = vmatprep.subr.mxu0 0.0
        %2421 = vmatpush1.msra.mxu0 0.0
        %2422 = vmatprep.subr.mxu0 0.0
        %2423 = vmatpush1.msra.mxu0 0.0
        %2424 = vmatprep.subr.mxu0 0.0
        %2425 = vmatpush1.msra.mxu0 0.0
        %2426 = vmatprep.subr.mxu0 0.0
        %2427 = vmatpush1.msra.mxu0 0.0
        %2428 = vmatprep.subr.mxu0 0.0
        %2429 = vmatpush1.msra.mxu0 0.0
        %2430 = vmatprep.subr.mxu0 0.0
        %2431 = vmatpush1.msra.mxu0 0.0
        %2432 = vmatprep.subr.mxu0 0.0
        %2433 = vmatpush1.msra.mxu0 0.0
        %2434 = vmatprep.subr.mxu0 0.0
        %2435 = vmatpush1.msra.mxu0 0.0
        %2436 = vmatprep.mubr.f32.mxu0 0.0
        %2437 = vmatmul.mubr.f32.gmra.mrb[0].mxu0 %v2370
        %v2438 = vpop.f32.mrb[0].mxu0
        %v2439 = vadd.f32 0.0, %v2438
        %v2440 = vpop.f32.mrb[0].mxu0
        %v2441 = vadd.f32 0.0, %v2440
        %2442 = vdwg.mxu0
        %v2443 = vadd.f32 %v2439, %v2441
        %2444 = vadd.xlane.f32.xlu0 %v2443
        %v2445 = vpop.xlane.xlu0 %2444
        %v2446 = vmul.f32 %v2445, %v891
        %v2447 = vmul.f32 %v2439, %v2439
        %v2448 = vmul.f32 %v2441, %v2441
        %v2449 = vadd.f32 %v2447, %v2448
        %2450 = vadd.xlane.f32.xlu0 %v2449
        %v2451 = vpop.xlane.xlu0 %2450
        %v2452 = vmul.f32 %v2451, %v891
        %v2453 = vmul.f32 %v2446, %v2446
        %v2454 = vsub.f32 %v2452, %v2453
        %v2455 = vsub.f32 %v2439, %v2446
        %v2456 = vsub.f32 %v2441, %v2446
        %v2457 = vadd.f32 %v2454, 1e-05
        %v2458 = vrsqrt.pop %v2457
        %v2459 = vmul.f32 %v2455, %v2458
        %v2460 = vmul.f32 %v2456, %v2458
        %v2461 = vmul.f32 %v2459, 0.01
        %v2462 = vmul.f32 %v2460, 0.01
        %v2463 = vmax.f32 %v2459, %v2461
        %v2464 = vmax.f32 %v2460, %v2462
        %v2465 = vld [vmem:[%s5] sm:$0x3]
        %2467 = vset.pattern.permute.xlu0 0
        %2468 = vperm.xlu0 %2467, %v317
        %v2469 = vpop.permute.xlu0 %2468
        %vm2471 = vcmask 64512
        %v2473 = vsel %vm2471, %v2465, 0
        %2475 = vmatprep.subr.mxu0 %v2464
        %2476 = vmatpush1.msra.mxu0 %v2463
        %2477 = vmatprep.subr.mxu0 0.0
        %2478 = vmatpush1.msra.mxu0 0.0
        %2479 = vmatprep.subr.mxu0 0.0
        %2480 = vmatpush1.msra.mxu0 0.0
        %2481 = vmatprep.subr.mxu0 0.0
        %2482 = vmatpush1.msra.mxu0 0.0
        %2483 = vmatprep.subr.mxu0 0.0
        %2484 = vmatpush1.msra.mxu0 0.0
        %2485 = vmatprep.subr.mxu0 0.0
        %2486 = vmatpush1.msra.mxu0 0.0
        %2487 = vmatprep.subr.mxu0 0.0
        %2488 = vmatpush1.msra.mxu0 0.0
        %2489 = vmatprep.subr.mxu0 0.0
        %2490 = vmatpush1.msra.mxu0 0.0
        %2491 = vmatprep.subr.mxu0 0.0
        %2492 = vmatpush1.msra.mxu0 0.0
        %2493 = vmatprep.subr.mxu0 0.0
        %2494 = vmatpush1.msra.mxu0 0.0
        %2495 = vmatprep.subr.mxu0 0.0
        %2496 = vmatpush1.msra.mxu0 0.0
        %2497 = vmatprep.subr.mxu0 0.0
        %2498 = vmatpush1.msra.mxu0 0.0
        %2499 = vmatprep.subr.mxu0 0.0
        %2500 = vmatpush1.msra.mxu0 0.0
        %2501 = vmatprep.subr.mxu0 0.0
        %2502 = vmatpush1.msra.mxu0 0.0
        %2503 = vmatprep.subr.mxu0 0.0
        %2504 = vmatpush1.msra.mxu0 0.0
        %2505 = vmatprep.subr.mxu0 0.0
        %2506 = vmatpush1.msra.mxu0 0.0
        %2507 = vmatprep.subr.mxu0 0.0
        %2508 = vmatpush1.msra.mxu0 0.0
        %2509 = vmatprep.subr.mxu0 0.0
        %2510 = vmatpush1.msra.mxu0 0.0
        %2511 = vmatprep.subr.mxu0 0.0
        %2512 = vmatpush1.msra.mxu0 0.0
        %2513 = vmatprep.subr.mxu0 0.0
        %2514 = vmatpush1.msra.mxu0 0.0
        %2515 = vmatprep.subr.mxu0 0.0
        %2516 = vmatpush1.msra.mxu0 0.0
        %2517 = vmatprep.subr.mxu0 0.0
        %2518 = vmatpush1.msra.mxu0 0.0
        %2519 = vmatprep.subr.mxu0 0.0
        %2520 = vmatpush1.msra.mxu0 0.0
        %2521 = vmatprep.subr.mxu0 0.0
        %2522 = vmatpush1.msra.mxu0 0.0
        %2523 = vmatprep.subr.mxu0 0.0
        %2524 = vmatpush1.msra.mxu0 0.0
        %2525 = vmatprep.subr.mxu0 0.0
        %2526 = vmatpush1.msra.mxu0 0.0
        %2527 = vmatprep.subr.mxu0 0.0
        %2528 = vmatpush1.msra.mxu0 0.0
        %2529 = vmatprep.subr.mxu0 0.0
        %2530 = vmatpush1.msra.mxu0 0.0
        %2531 = vmatprep.subr.mxu0 0.0
        %2532 = vmatpush1.msra.mxu0 0.0
        %2533 = vmatprep.subr.mxu0 0.0
        %2534 = vmatpush1.msra.mxu0 0.0
        %2535 = vmatprep.subr.mxu0 0.0
        %2536 = vmatpush1.msra.mxu0 0.0
        %2537 = vmatprep.subr.mxu0 0.0
        %2538 = vmatpush1.msra.mxu0 0.0
        %2539 = vmatprep.mubr.f32.mxu0 0.0
        %2540 = vmatmul.mubr.f32.gmra.mrb[0].mxu0 %v2473
        %v2541 = vpop.f32.mrb[0].mxu0
        %v2542 = vadd.f32 %v2469, %v2541
        %v2543 = vpop.f32.mrb[0].mxu0
        %v2544 = vadd.f32 %v2469, %v2543
        %2545 = vdwg.mxu0
        %v2548 = vunpack.c.l.s4 1983009808
        %v2549 = vunpack.c.0.s8 %v2548
        %v2550 = vlaneseq
        %v2551 = vshrl.u32 %v2550, 7
        %v2552 = vsub.s32 %v2549, %v2551
        %v2553 = vrot.slane %v318, %v2552
        %v2554 = vcombine.high %v2553, %v2553
        %v2557 = vadd.f32 %v2542, %v2553
        %v2558 = vadd.f32 %v2544, %v2554
        %v2561 = vcombine.low %v2557, %v2558
        %v2563 = vunpack.c.l.s4 1983009808
        %v2564 = vunpack.c.0.s8 %v2563
        %v2565 = vlaneseq
        %v2566 = vshrl.u32 %v2565, 7
        %v2567 = vsub.s32 %v2564, %v2566
        %v2568 = vrot.slane %v2561, %v2567
        %2570 = vst [vmem:[%s298] sm:$0xf] %v2568
        %s2571 = sand.u32 %s203, 1
        %s2572 = scalar_lea.sflag [#allocation4], %s2571
        %s2573 = sand.u32 %s203, 1
        %s2574 = smul.addr %s2573, 4
        %s2575 = scalar_lea.vmem [#allocation3], %s2574
        // Predicated region
        $region53: #{tpu_custom_call.1} parent=51 // pred_check
          %p2576 = pneg %p213
        $region54: #{tpu_custom_call.1} parent=51 // pred_check_branch
          %2578 = sbr.rel (%p2576) target = $region56
        $region55: #{tpu_custom_call.1} parent=51 // pred_region
          %s2580 = ssub.s32 64, 64
          %2581 = vsyncadd %s2572, %s2580
          %s2582 = smul.addr %s22, 2
          %s2583 = smul.addr %s2582, 32
          %s2584 = scalar_lea.hbm %s8, %s2583
          %s2586 = sshll.u32 %s2575, 4
          %s2587 = int_to_ptr.vmem [resolvable:$true] %s2586
          %2589 = dma.vmem_to_hbm [thread:$0]  %s2587, 64, %s2584, %s2572
        $region56: #{tpu_custom_call.1} parent=51 // pred_fallthru
          _
      $region52: #{tpu_custom_call.1} parent=5 // pred_fallthru
        _
      %p2590 = scmp.le.s32.totalorder 2, %s17
      // Predicated region
      $region57: #{tpu_custom_call.1} parent=5 // pred_check
        %p2591 = pneg %p2590
      $region58: #{tpu_custom_call.1} parent=5 // pred_check_branch
        %2593 = sbr.rel (%p2591) target = $region60
      $region59: #{tpu_custom_call.1} parent=5 // pred_region
        %s2594 = ssub.s32 %s17, 2
        // Predicated region
        $region61: #{tpu_custom_call.1} parent=59 // pred_check
          %p2595 = pneg %p219
        $region62: #{tpu_custom_call.1} parent=59 // pred_check_branch
          %2597 = sbr.rel (%p2595) target = $region64
        $region63: #{tpu_custom_call.1} parent=59 // pred_region
          %s2598 = sand.u32 %s204, 1
          %s2599 = scalar_lea.sflag [#allocation4], %s2598
          %s2600 = sand.u32 %s204, 1
          %s2601 = smul.addr %s2600, 4
          %s2602 = scalar_lea.vmem [#allocation3], %s2601
          %2603 = dma.done %s2599, 64
        $region64: #{tpu_custom_call.1} parent=59 // pred_fallthru
          _
      $region60: #{tpu_custom_call.1} parent=5 // pred_fallthru
        _
    $region6: #{tpu_custom_call.1} parent=1 // loop_footer
      %s21 = sadd.s32 1, %s17
    $region7: #{tpu_custom_call.1} parent=1 // loop_footer_branch
      %16 = sbr.rel target = $region3
    $region8: #{tpu_custom_call.1} parent=1 // loop_exit
      _
    %2604 = vsyncpa [#allocation4], 1
    %s2605 = scalar_lea.sflag [#allocation4], 1
    %2606 = vsyncpa %s2605, 1

</llo_original>
